<compile_context>
chip_gen: v6e
topology: v6e:2x2x1
jax: 0.10.0
libtpu: 0.0.40
codegen_flags: <defaults>
</compile_context>

<pallas_src>
import jax
import jax.numpy as jnp
from jax.experimental import pallas as pl
from jax.experimental.pallas import tpu as pltpu

# ---- config (mirrors cf.lstm_cnn_char_word) ----
NUM_CLASSES     = 5
WORD_EMB_DIM    = 16
HIDDEN_WORD     = 32
CHAR_EMB_DIM    = 8
CHAR_FILTER_NUM = 8
CHAR_WINDOWS    = (2, 3)
HIDDEN_CHAR     = CHAR_FILTER_NUM * len(CHAR_WINDOWS)   # 16
HIDDEN_FC       = 24
REDUCE_SIZE     = True
NUM_LAYER_LSTM  = 1          # num_layer_lstm_word

VOCAB_WORD = 50
VOCAB_CHAR = 30

B       = 2    # logical batch
BP      = 8    # padded batch (one full sublane tile)
T_WORD  = 8    # word sequence length
L_CHAR  = 12   # char sequence length
OUT_PAD = 128  # lane-dense padded output width (also == 4*HIDDEN_WORD)

# padded "vocab" widths for the in-kernel one-hot gathers (8-aligned)
VW_PAD  = 56
VC_PAD  = 32
DC_PAD  = 16   # char channels padded to 2*CHAR_FILTER_NUM lanes

# ---- slab A (128-lane) row layout: all offsets are multiples of 8 ----
A_WEMB  = 0                    # (VW_PAD, 128)  word_emb_table @ W_ih  (fused)
A_WHH   = 56                   # (H, 128)       W_hh
A_BLSTM = 88                   # (1, 128)       b_ih + b_hh
A_WWORD = 96                   # (H, 128)       w_fc[:H]  @ w_label   (padded to 128)
A_WCHAR = 128                  # (2F, 128)      w_fc[H:]  @ w_label   (padded to 128)
A_BOUT  = 144                  # (1, 128)       b_fc @ w_label + b_label
A_ROWS  = 152

# ---- slab B (16-lane) row layout ----
B_CTBL  = 0                    # (VC_PAD, 16)   char table in cols [0:Dc)
B_WM    = 32                   # (3*DC_PAD, 16) merged conv taps, cols [conv2 | conv3]
B_WE    = 80                   # (2*DC_PAD, 16) conv2 extra-position taps, conv3 cols zero
B_BM    = 112                  # (1, 16)        [b_conv2 | b_conv3]
B_BE    = 120                  # (1, 16)        [b_conv2 | 0]
B_ROWS  = 128


def lstm_cnn_kernel(ids_ref, wa_ref, wb_ref, out_ref):
    f32 = jnp.float32
    H, T, Lc, F = HIDDEN_WORD, T_WORD, L_CHAR, CHAR_FILTER_NUM

    # -------- word path: one-hot ids @ (wtbl @ W_ih) -> gate pre-activations ------
    wid = ids_ref[0:T * BP, :]                                        # (T*BP, 1) int32, (t, b)
    iota_w = jax.lax.broadcasted_iota(jnp.int32, (T * BP, VW_PAD), 1)
    oh_w = jnp.where(wid == iota_w, 1.0, 0.0)                         # (T*BP, VW_PAD)
    gates_x = (jnp.dot(oh_w, wa_ref[A_WEMB:A_WEMB + VW_PAD, :],
                       preferred_element_type=f32)
               + wa_ref[A_BLSTM:A_BLSTM + 1, :])                      # (T*BP, 4H)
    gates_x = gates_x.reshape(T, BP, 4 * H)                           # layout-trivial (BP == 8)

    # -------- LSTM (1 layer, unidirectional), gate order i,f,g,o --------
    whh = wa_ref[A_WHH:A_WHH + H, :]                                  # read once, loop-invariant RHS
    h = jnp.zeros((BP, H), f32)
    c = jnp.zeros((BP, H), f32)
    outs = []
    for t in range(T):                                                # static unroll, T = 8
        gates = gates_x[t] + jnp.dot(h, whh, preferred_element_type=f32)   # (BP, 4H)
        sg = jax.nn.sigmoid(gates)                                    # full-vreg EUP pass
        tg = jnp.tanh(gates)                                          # full-vreg EUP pass
        i_g = sg[:, 0 * H:1 * H]
        f_g = sg[:, 1 * H:2 * H]
        g_g = tg[:, 2 * H:3 * H]
        o_g = sg[:, 3 * H:4 * H]
        c = f_g * c + i_g * g_g
        h = o_g * jnp.tanh(c)
        outs.append(h)
    # h == final_hidden_state_word.squeeze(0)

    # -------- attention_net (stacked, softmax over timesteps) --------
    outs3 = jnp.stack(outs, axis=0)                                   # (T, BP, H)
    scores = jnp.sum(outs3 * h[None, :, :], axis=-1, keepdims=True)   # (T, BP, 1)
    m = jnp.max(scores, axis=0, keepdims=True)
    e = jnp.exp(scores - m)
    attn = e / jnp.sum(e, axis=0, keepdims=True)                      # exact softmax
    word_ft = jnp.sum(attn * outs3, axis=0)                           # (BP, H)

    # -------- fused (fc @ label) output: start accumulator with the word part -----
    acc = (jnp.dot(word_ft, wa_ref[A_WWORD:A_WWORD + H, :], preferred_element_type=f32)
           + wa_ref[A_BOUT:A_BOUT + 1, :])                            # (BP, 128)

    # -------- char path (computed late: short vreg live range) --------
    # TODO(synk): CNNFeatureExtract source is not given; standard valid conv1d + ReLU +
    #             max-pool over length assumed, dropout_cnn = identity at inference.
    cid = ids_ref[T * BP:(T + Lc) * BP, :]                            # (Lc*BP, 1) int32, (l, b)
    iota_c = jax.lax.broadcasted_iota(jnp.int32, (Lc * BP, VC_PAD), 1)
    oh_c = jnp.where(cid == iota_c, 1.0, 0.0)                         # (Lc*BP, VC_PAD)
    xc = jnp.dot(oh_c, wb_ref[B_CTBL:B_CTBL + VC_PAD, :],
                 preferred_element_type=f32)                          # (Lc*BP, DC_PAD)
    xc3 = xc.reshape(Lc, BP, DC_PAD)                                  # layout-trivial

    # merged conv2(+zero 3rd tap) / conv3 over the shared k=3 valid window
    Lw = Lc - 3 + 1                                                   # 10 positions
    y = jnp.dot(xc3[0:Lw].reshape(Lw * BP, DC_PAD),
                wb_ref[B_WM:B_WM + DC_PAD, :], preferred_element_type=f32)
    for j in range(1, 3):                                             # conv = sum of shifted slabs
        y = y + jnp.dot(xc3[j:j + Lw].reshape(Lw * BP, DC_PAD),
                        wb_ref[B_WM + j * DC_PAD:B_WM + (j + 1) * DC_PAD, :],
                        preferred_element_type=f32)
    y = jnp.maximum(y + wb_ref[B_BM:B_BM + 1, :], 0.0)                # ReLU, both conv halves
    pool = jnp.max(y.reshape(Lw, BP, 2 * F), axis=0)                  # (BP, 2F) = [conv2 | conv3]

    # conv2's extra valid position p = Lc-2 (conv3 cols are zero-weighted/biased)
    y_e = (jnp.dot(xc3[Lc - 2], wb_ref[B_WE:B_WE + DC_PAD, :], preferred_element_type=f32)
           + jnp.dot(xc3[Lc - 1], wb_ref[B_WE + DC_PAD:B_WE + 2 * DC_PAD, :],
                     preferred_element_type=f32)
           + wb_ref[B_BE:B_BE + 1, :])                                # (BP, 2F)
    pool = jnp.maximum(pool, jnp.maximum(y_e, 0.0))                   # conv3 half unchanged (>=0 vs 0)

    # char part of the fused output
    acc = acc + jnp.dot(pool, wa_ref[A_WCHAR:A_WCHAR + 2 * F, :],
                        preferred_element_type=f32)
    out_ref[...] = acc                                                # (BP, 128) lane-dense store


def init_params(key):
    ks = jax.random.split(key, 12)

    def nrm(k, shape, scale=0.1):
        return jax.random.normal(k, shape, jnp.float32) * scale

    return dict(
        word_emb_table=nrm(ks[0], (VOCAB_WORD, WORD_EMB_DIM)),
        char_emb_table=nrm(ks[1], (VOCAB_CHAR, CHAR_EMB_DIM)),
        w_ih=nrm(ks[2], (WORD_EMB_DIM, 4 * HIDDEN_WORD)),
        w_hh=nrm(ks[3], (HIDDEN_WORD, 4 * HIDDEN_WORD)),
        b_lstm=nrm(ks[4], (1, 4 * HIDDEN_WORD)),          # = b_ih + b_hh
        w_conv2=nrm(ks[5], (2 * CHAR_EMB_DIM, CHAR_FILTER_NUM)),
        b_conv2=nrm(ks[6], (1, CHAR_FILTER_NUM)),
        w_conv3=nrm(ks[7], (3 * CHAR_EMB_DIM, CHAR_FILTER_NUM)),
        b_conv3=nrm(ks[8], (1, CHAR_FILTER_NUM)),
        w_fc=nrm(ks[9], (HIDDEN_WORD + HIDDEN_CHAR, HIDDEN_FC)),
        b_fc=jnp.zeros((1, HIDDEN_FC), jnp.float32),
        w_label=nrm(ks[10], (HIDDEN_FC, NUM_CLASSES)),
        b_label=jnp.zeros((1, NUM_CLASSES), jnp.float32),
    )


def prepare_params(p):
    """One-time (outside the hot path) fold + repack into two kernel slabs:
    - word embedding folded into W_ih (wtbl @ W_ih),
    - reduce_size FC folded into the label layer (exact: the reference has no
      activation/dropout between fc and label),
    - conv2 zero-padded to 3 taps and packed with conv3 along output lanes,
    - everything padded to 8-aligned rows / lane-dense widths."""
    H, F, Dc = HIDDEN_WORD, CHAR_FILTER_NUM, CHAR_EMB_DIM
    f32 = jnp.float32

    w_emb_ih = p['word_emb_table'] @ p['w_ih']                # (Vw, 4H)
    w_lab = p['w_label']                                      # (HIDDEN_FC, C)
    w_word_out = p['w_fc'][:H] @ w_lab                        # (H, C)
    w_char_out = p['w_fc'][H:] @ w_lab                        # (2F, C), rows [conv2; conv3]
    b_out = p['b_fc'] @ w_lab + p['b_label']                  # (1, C)

    slab_a = jnp.zeros((A_ROWS, OUT_PAD), f32)
    slab_a = slab_a.at[A_WEMB:A_WEMB + VOCAB_WORD, :].set(w_emb_ih)
    slab_a = slab_a.at[A_WHH:A_WHH + H, :].set(p['w_hh'])
    slab_a = slab_a.at[A_BLSTM, :].set(p['b_lstm'][0])
    slab_a = slab_a.at[A_WWORD:A_WWORD + H, :NUM_CLASSES].set(w_word_out)
    slab_a = slab_a.at[A_WCHAR:A_WCHAR + 2 * F, :NUM_CLASSES].set(w_char_out)
    slab_a = slab_a.at[A_BOUT, :NUM_CLASSES].set(b_out[0])

    slab_b = jnp.zeros((B_ROWS, 2 * F), f32)
    slab_b = slab_b.at[B_CTBL:B_CTBL + VOCAB_CHAR, :Dc].set(p['char_emb_table'])
    for j in range(2):   # conv2 taps into cols [0:F), channels padded Dc -> DC_PAD
        slab_b = slab_b.at[B_WM + j * DC_PAD:B_WM + j * DC_PAD + Dc, :F].set(
            p['w_conv2'][j * Dc:(j + 1) * Dc])
    for j in range(3):   # conv3 taps into cols [F:2F)
        slab_b = slab_b.at[B_WM + j * DC_PAD:B_WM + j * DC_PAD + Dc, F:].set(
            p['w_conv3'][j * Dc:(j + 1) * Dc])
    for j in range(2):   # conv2 extra-position taps (conv3 cols stay zero)
        slab_b = slab_b.at[B_WE + j * DC_PAD:B_WE + j * DC_PAD + Dc, :F].set(
            p['w_conv2'][j * Dc:(j + 1) * Dc])
    slab_b = slab_b.at[B_BM, :F].set(p['b_conv2'][0])
    slab_b = slab_b.at[B_BM, F:].set(p['b_conv3'][0])
    slab_b = slab_b.at[B_BE, :F].set(p['b_conv2'][0])

    return dict(slab_a=slab_a, slab_b=slab_b)


@jax.jit
def forward(kparams, word_ids, char_ids):
    Bi = word_ids.shape[0]
    # Single fused id-prep: pad batch to BP, time/position-major, one int32 block.
    ids = jnp.zeros((T_WORD + L_CHAR, BP), jnp.int32)
    ids = ids.at[:T_WORD, :Bi].set(word_ids.T).at[T_WORD:, :Bi].set(char_ids.T)
    ids = ids.reshape((T_WORD + L_CHAR) * BP, 1)

    vmem = pl.BlockSpec(memory_space=pltpu.MemorySpace.VMEM)
    logits_pad = pl.pallas_call(
        lstm_cnn_kernel,
        out_shape=jax.ShapeDtypeStruct((BP, OUT_PAD), jnp.float32),
        in_specs=[vmem, vmem, vmem],
        out_specs=vmem,
    )(ids, kparams['slab_a'], kparams['slab_b'])
    # Latency-sensitive callers can consume the padded (BP, 128) block directly.
    return logits_pad[:Bi, :NUM_CLASSES]


if __name__ == "__main__":
    key = jax.random.PRNGKey(0)
    k_params, k_word, k_char = jax.random.split(key, 3)
    params = init_params(k_params)
    kparams = prepare_params(params)        # one-time fold + repack, outside the hot path

    word_ids = jax.random.randint(k_word, (B, T_WORD), 0, VOCAB_WORD, dtype=jnp.int32)
    char_ids = jax.random.randint(k_char, (B, L_CHAR), 0, VOCAB_CHAR, dtype=jnp.int32)

    out = forward(kparams, word_ids, char_ids)
    jax.block_until_ready(out)
    assert out.shape == (B, NUM_CLASSES) and out.dtype == jnp.float32
    print("KERNEL_OK")
</pallas_src>

<mosaic_0001>
module attributes {stable_mosaic.version = 11 : i64} {
  func.func @lstm_cnn_kernel(%arg0: memref<160x1xi32, #tpu.memory_space<vmem>>, %arg1: memref<152x128xf32, #tpu.memory_space<vmem>>, %arg2: memref<128x16xf32, #tpu.memory_space<vmem>>, %arg3: memref<8x128xf32, #tpu.memory_space<vmem>>) attributes {dimension_semantics = [], scalar_prefetch = 0 : i64, scratch_operands = 0 : i64, tpu.core_type = #tpu.core_type<tc>} {
    %c0 = arith.constant 0 : index
    %c0_0 = arith.constant 0 : index
    %0 = vector.load %arg0[%c0, %c0_0] : memref<160x1xi32, #tpu.memory_space<vmem>>, vector<64x1xi32>
    %1 = tpu.iota {dimensions = array<i32: 1>} : vector<64x56xi32>
    %2 = vector.broadcast %0 : vector<64x1xi32> to vector<64x56xi32>
    %3 = arith.cmpi eq, %2, %1 : vector<64x56xi32>
    %cst = arith.constant 1.000000e+00 : f32
    %cst_1 = arith.constant 0.000000e+00 : f32
    %4 = vector.broadcast %cst : f32 to vector<64x56xf32>
    %5 = vector.broadcast %cst_1 : f32 to vector<64x56xf32>
    %6 = arith.select %3, %4, %5 : vector<64x56xi1>, vector<64x56xf32>
    %c0_2 = arith.constant 0 : index
    %c0_3 = arith.constant 0 : index
    %7 = vector.load %arg1[%c0_2, %c0_3] : memref<152x128xf32, #tpu.memory_space<vmem>>, vector<56x128xf32>
    %cst_4 = arith.constant dense<0.000000e+00> : vector<64x128xf32>
    %8 = tpu.matmul %6, %7, %cst_4 {dimension_numbers = #tpu.dot_dimension_numbers<[1], [0], [0], [1], [0, 0, 1, 1], [], []>} : vector<64x56xf32>, vector<56x128xf32>, vector<64x128xf32> -> vector<64x128xf32>
    %c88 = arith.constant 88 : index
    %c0_5 = arith.constant 0 : index
    %9 = vector.load %arg1[%c88, %c0_5] : memref<152x128xf32, #tpu.memory_space<vmem>>, vector<1x128xf32>
    %10 = vector.broadcast %9 : vector<1x128xf32> to vector<64x128xf32>
    %11 = arith.addf %8, %10 : vector<64x128xf32>
    %12 = vector.shape_cast %11 : vector<64x128xf32> to vector<8x8x128xf32>
    %c56 = arith.constant 56 : index
    %c0_6 = arith.constant 0 : index
    %13 = vector.load %arg1[%c56, %c0_6] : memref<152x128xf32, #tpu.memory_space<vmem>>, vector<32x128xf32>
    %cst_7 = arith.constant 0.000000e+00 : f32
    %14 = vector.broadcast %cst_7 : f32 to vector<8x32xf32>
    %cst_8 = arith.constant 0.000000e+00 : f32
    %15 = vector.broadcast %cst_8 : f32 to vector<8x32xf32>
    %16 = vector.extract_strided_slice %12 {offsets = [0, 0, 0], sizes = [1, 8, 128], strides = [1, 1, 1]} : vector<8x8x128xf32> to vector<1x8x128xf32>
    %17 = vector.shape_cast %16 : vector<1x8x128xf32> to vector<8x128xf32>
    %cst_9 = arith.constant dense<0.000000e+00> : vector<8x128xf32>
    %18 = tpu.matmul %14, %13, %cst_9 {dimension_numbers = #tpu.dot_dimension_numbers<[1], [0], [0], [1], [0, 0, 1, 1], [], []>} : vector<8x32xf32>, vector<32x128xf32>, vector<8x128xf32> -> vector<8x128xf32>
    %19 = arith.addf %17, %18 : vector<8x128xf32>
    %20 = arith.negf %19 : vector<8x128xf32>
    %21 = math.exp %20 : vector<8x128xf32>
    %cst_10 = arith.constant 1.000000e+00 : f32
    %22 = vector.broadcast %cst_10 : f32 to vector<8x128xf32>
    %23 = arith.addf %22, %21 : vector<8x128xf32>
    %24 = arith.divf %22, %23 : vector<8x128xf32>
    %25 = math.tanh %19 : vector<8x128xf32>
    %26 = vector.extract_strided_slice %24 {offsets = [0, 0], sizes = [8, 32], strides = [1, 1]} : vector<8x128xf32> to vector<8x32xf32>
    %27 = vector.extract_strided_slice %24 {offsets = [0, 32], sizes = [8, 32], strides = [1, 1]} : vector<8x128xf32> to vector<8x32xf32>
    %28 = vector.extract_strided_slice %25 {offsets = [0, 64], sizes = [8, 32], strides = [1, 1]} : vector<8x128xf32> to vector<8x32xf32>
    %29 = vector.extract_strided_slice %24 {offsets = [0, 96], sizes = [8, 32], strides = [1, 1]} : vector<8x128xf32> to vector<8x32xf32>
    %30 = arith.mulf %27, %15 : vector<8x32xf32>
    %31 = arith.mulf %26, %28 : vector<8x32xf32>
    %32 = arith.addf %30, %31 : vector<8x32xf32>
    %33 = math.tanh %32 : vector<8x32xf32>
    %34 = arith.mulf %29, %33 : vector<8x32xf32>
    %35 = vector.extract_strided_slice %12 {offsets = [1, 0, 0], sizes = [1, 8, 128], strides = [1, 1, 1]} : vector<8x8x128xf32> to vector<1x8x128xf32>
    %36 = vector.shape_cast %35 : vector<1x8x128xf32> to vector<8x128xf32>
    %cst_11 = arith.constant dense<0.000000e+00> : vector<8x128xf32>
    %37 = tpu.matmul %34, %13, %cst_11 {dimension_numbers = #tpu.dot_dimension_numbers<[1], [0], [0], [1], [0, 0, 1, 1], [], []>} : vector<8x32xf32>, vector<32x128xf32>, vector<8x128xf32> -> vector<8x128xf32>
    %38 = arith.addf %36, %37 : vector<8x128xf32>
    %39 = arith.negf %38 : vector<8x128xf32>
    %40 = math.exp %39 : vector<8x128xf32>
    %cst_12 = arith.constant 1.000000e+00 : f32
    %41 = vector.broadcast %cst_12 : f32 to vector<8x128xf32>
    %42 = arith.addf %41, %40 : vector<8x128xf32>
    %43 = arith.divf %41, %42 : vector<8x128xf32>
    %44 = math.tanh %38 : vector<8x128xf32>
    %45 = vector.extract_strided_slice %43 {offsets = [0, 0], sizes = [8, 32], strides = [1, 1]} : vector<8x128xf32> to vector<8x32xf32>
    %46 = vector.extract_strided_slice %43 {offsets = [0, 32], sizes = [8, 32], strides = [1, 1]} : vector<8x128xf32> to vector<8x32xf32>
    %47 = vector.extract_strided_slice %44 {offsets = [0, 64], sizes = [8, 32], strides = [1, 1]} : vector<8x128xf32> to vector<8x32xf32>
    %48 = vector.extract_strided_slice %43 {offsets = [0, 96], sizes = [8, 32], strides = [1, 1]} : vector<8x128xf32> to vector<8x32xf32>
    %49 = arith.mulf %46, %32 : vector<8x32xf32>
    %50 = arith.mulf %45, %47 : vector<8x32xf32>
    %51 = arith.addf %49, %50 : vector<8x32xf32>
    %52 = math.tanh %51 : vector<8x32xf32>
    %53 = arith.mulf %48, %52 : vector<8x32xf32>
    %54 = vector.extract_strided_slice %12 {offsets = [2, 0, 0], sizes = [1, 8, 128], strides = [1, 1, 1]} : vector<8x8x128xf32> to vector<1x8x128xf32>
    %55 = vector.shape_cast %54 : vector<1x8x128xf32> to vector<8x128xf32>
    %cst_13 = arith.constant dense<0.000000e+00> : vector<8x128xf32>
    %56 = tpu.matmul %53, %13, %cst_13 {dimension_numbers = #tpu.dot_dimension_numbers<[1], [0], [0], [1], [0, 0, 1, 1], [], []>} : vector<8x32xf32>, vector<32x128xf32>, vector<8x128xf32> -> vector<8x128xf32>
    %57 = arith.addf %55, %56 : vector<8x128xf32>
    %58 = arith.negf %57 : vector<8x128xf32>
    %59 = math.exp %58 : vector<8x128xf32>
    %cst_14 = arith.constant 1.000000e+00 : f32
    %60 = vector.broadcast %cst_14 : f32 to vector<8x128xf32>
    %61 = arith.addf %60, %59 : vector<8x128xf32>
    %62 = arith.divf %60, %61 : vector<8x128xf32>
    %63 = math.tanh %57 : vector<8x128xf32>
    %64 = vector.extract_strided_slice %62 {offsets = [0, 0], sizes = [8, 32], strides = [1, 1]} : vector<8x128xf32> to vector<8x32xf32>
    %65 = vector.extract_strided_slice %62 {offsets = [0, 32], sizes = [8, 32], strides = [1, 1]} : vector<8x128xf32> to vector<8x32xf32>
    %66 = vector.extract_strided_slice %63 {offsets = [0, 64], sizes = [8, 32], strides = [1, 1]} : vector<8x128xf32> to vector<8x32xf32>
    %67 = vector.extract_strided_slice %62 {offsets = [0, 96], sizes = [8, 32], strides = [1, 1]} : vector<8x128xf32> to vector<8x32xf32>
    %68 = arith.mulf %65, %51 : vector<8x32xf32>
    %69 = arith.mulf %64, %66 : vector<8x32xf32>
    %70 = arith.addf %68, %69 : vector<8x32xf32>
    %71 = math.tanh %70 : vector<8x32xf32>
    %72 = arith.mulf %67, %71 : vector<8x32xf32>
    %73 = vector.extract_strided_slice %12 {offsets = [3, 0, 0], sizes = [1, 8, 128], strides = [1, 1, 1]} : vector<8x8x128xf32> to vector<1x8x128xf32>
    %74 = vector.shape_cast %73 : vector<1x8x128xf32> to vector<8x128xf32>
    %cst_15 = arith.constant dense<0.000000e+00> : vector<8x128xf32>
    %75 = tpu.matmul %72, %13, %cst_15 {dimension_numbers = #tpu.dot_dimension_numbers<[1], [0], [0], [1], [0, 0, 1, 1], [], []>} : vector<8x32xf32>, vector<32x128xf32>, vector<8x128xf32> -> vector<8x128xf32>
    %76 = arith.addf %74, %75 : vector<8x128xf32>
    %77 = arith.negf %76 : vector<8x128xf32>
    %78 = math.exp %77 : vector<8x128xf32>
    %cst_16 = arith.constant 1.000000e+00 : f32
    %79 = vector.broadcast %cst_16 : f32 to vector<8x128xf32>
    %80 = arith.addf %79, %78 : vector<8x128xf32>
    %81 = arith.divf %79, %80 : vector<8x128xf32>
    %82 = math.tanh %76 : vector<8x128xf32>
    %83 = vector.extract_strided_slice %81 {offsets = [0, 0], sizes = [8, 32], strides = [1, 1]} : vector<8x128xf32> to vector<8x32xf32>
    %84 = vector.extract_strided_slice %81 {offsets = [0, 32], sizes = [8, 32], strides = [1, 1]} : vector<8x128xf32> to vector<8x32xf32>
    %85 = vector.extract_strided_slice %82 {offsets = [0, 64], sizes = [8, 32], strides = [1, 1]} : vector<8x128xf32> to vector<8x32xf32>
    %86 = vector.extract_strided_slice %81 {offsets = [0, 96], sizes = [8, 32], strides = [1, 1]} : vector<8x128xf32> to vector<8x32xf32>
    %87 = arith.mulf %84, %70 : vector<8x32xf32>
    %88 = arith.mulf %83, %85 : vector<8x32xf32>
    %89 = arith.addf %87, %88 : vector<8x32xf32>
    %90 = math.tanh %89 : vector<8x32xf32>
    %91 = arith.mulf %86, %90 : vector<8x32xf32>
    %92 = vector.extract_strided_slice %12 {offsets = [4, 0, 0], sizes = [1, 8, 128], strides = [1, 1, 1]} : vector<8x8x128xf32> to vector<1x8x128xf32>
    %93 = vector.shape_cast %92 : vector<1x8x128xf32> to vector<8x128xf32>
    %cst_17 = arith.constant dense<0.000000e+00> : vector<8x128xf32>
    %94 = tpu.matmul %91, %13, %cst_17 {dimension_numbers = #tpu.dot_dimension_numbers<[1], [0], [0], [1], [0, 0, 1, 1], [], []>} : vector<8x32xf32>, vector<32x128xf32>, vector<8x128xf32> -> vector<8x128xf32>
    %95 = arith.addf %93, %94 : vector<8x128xf32>
    %96 = arith.negf %95 : vector<8x128xf32>
    %97 = math.exp %96 : vector<8x128xf32>
    %cst_18 = arith.constant 1.000000e+00 : f32
    %98 = vector.broadcast %cst_18 : f32 to vector<8x128xf32>
    %99 = arith.addf %98, %97 : vector<8x128xf32>
    %100 = arith.divf %98, %99 : vector<8x128xf32>
    %101 = math.tanh %95 : vector<8x128xf32>
    %102 = vector.extract_strided_slice %100 {offsets = [0, 0], sizes = [8, 32], strides = [1, 1]} : vector<8x128xf32> to vector<8x32xf32>
    %103 = vector.extract_strided_slice %100 {offsets = [0, 32], sizes = [8, 32], strides = [1, 1]} : vector<8x128xf32> to vector<8x32xf32>
    %104 = vector.extract_strided_slice %101 {offsets = [0, 64], sizes = [8, 32], strides = [1, 1]} : vector<8x128xf32> to vector<8x32xf32>
    %105 = vector.extract_strided_slice %100 {offsets = [0, 96], sizes = [8, 32], strides = [1, 1]} : vector<8x128xf32> to vector<8x32xf32>
    %106 = arith.mulf %103, %89 : vector<8x32xf32>
    %107 = arith.mulf %102, %104 : vector<8x32xf32>
    %108 = arith.addf %106, %107 : vector<8x32xf32>
    %109 = math.tanh %108 : vector<8x32xf32>
    %110 = arith.mulf %105, %109 : vector<8x32xf32>
    %111 = vector.extract_strided_slice %12 {offsets = [5, 0, 0], sizes = [1, 8, 128], strides = [1, 1, 1]} : vector<8x8x128xf32> to vector<1x8x128xf32>
    %112 = vector.shape_cast %111 : vector<1x8x128xf32> to vector<8x128xf32>
    %cst_19 = arith.constant dense<0.000000e+00> : vector<8x128xf32>
    %113 = tpu.matmul %110, %13, %cst_19 {dimension_numbers = #tpu.dot_dimension_numbers<[1], [0], [0], [1], [0, 0, 1, 1], [], []>} : vector<8x32xf32>, vector<32x128xf32>, vector<8x128xf32> -> vector<8x128xf32>
    %114 = arith.addf %112, %113 : vector<8x128xf32>
    %115 = arith.negf %114 : vector<8x128xf32>
    %116 = math.exp %115 : vector<8x128xf32>
    %cst_20 = arith.constant 1.000000e+00 : f32
    %117 = vector.broadcast %cst_20 : f32 to vector<8x128xf32>
    %118 = arith.addf %117, %116 : vector<8x128xf32>
    %119 = arith.divf %117, %118 : vector<8x128xf32>
    %120 = math.tanh %114 : vector<8x128xf32>
    %121 = vector.extract_strided_slice %119 {offsets = [0, 0], sizes = [8, 32], strides = [1, 1]} : vector<8x128xf32> to vector<8x32xf32>
    %122 = vector.extract_strided_slice %119 {offsets = [0, 32], sizes = [8, 32], strides = [1, 1]} : vector<8x128xf32> to vector<8x32xf32>
    %123 = vector.extract_strided_slice %120 {offsets = [0, 64], sizes = [8, 32], strides = [1, 1]} : vector<8x128xf32> to vector<8x32xf32>
    %124 = vector.extract_strided_slice %119 {offsets = [0, 96], sizes = [8, 32], strides = [1, 1]} : vector<8x128xf32> to vector<8x32xf32>
    %125 = arith.mulf %122, %108 : vector<8x32xf32>
    %126 = arith.mulf %121, %123 : vector<8x32xf32>
    %127 = arith.addf %125, %126 : vector<8x32xf32>
    %128 = math.tanh %127 : vector<8x32xf32>
    %129 = arith.mulf %124, %128 : vector<8x32xf32>
    %130 = vector.extract_strided_slice %12 {offsets = [6, 0, 0], sizes = [1, 8, 128], strides = [1, 1, 1]} : vector<8x8x128xf32> to vector<1x8x128xf32>
    %131 = vector.shape_cast %130 : vector<1x8x128xf32> to vector<8x128xf32>
    %cst_21 = arith.constant dense<0.000000e+00> : vector<8x128xf32>
    %132 = tpu.matmul %129, %13, %cst_21 {dimension_numbers = #tpu.dot_dimension_numbers<[1], [0], [0], [1], [0, 0, 1, 1], [], []>} : vector<8x32xf32>, vector<32x128xf32>, vector<8x128xf32> -> vector<8x128xf32>
    %133 = arith.addf %131, %132 : vector<8x128xf32>
    %134 = arith.negf %133 : vector<8x128xf32>
    %135 = math.exp %134 : vector<8x128xf32>
    %cst_22 = arith.constant 1.000000e+00 : f32
    %136 = vector.broadcast %cst_22 : f32 to vector<8x128xf32>
    %137 = arith.addf %136, %135 : vector<8x128xf32>
    %138 = arith.divf %136, %137 : vector<8x128xf32>
    %139 = math.tanh %133 : vector<8x128xf32>
    %140 = vector.extract_strided_slice %138 {offsets = [0, 0], sizes = [8, 32], strides = [1, 1]} : vector<8x128xf32> to vector<8x32xf32>
    %141 = vector.extract_strided_slice %138 {offsets = [0, 32], sizes = [8, 32], strides = [1, 1]} : vector<8x128xf32> to vector<8x32xf32>
    %142 = vector.extract_strided_slice %139 {offsets = [0, 64], sizes = [8, 32], strides = [1, 1]} : vector<8x128xf32> to vector<8x32xf32>
    %143 = vector.extract_strided_slice %138 {offsets = [0, 96], sizes = [8, 32], strides = [1, 1]} : vector<8x128xf32> to vector<8x32xf32>
    %144 = arith.mulf %141, %127 : vector<8x32xf32>
    %145 = arith.mulf %140, %142 : vector<8x32xf32>
    %146 = arith.addf %144, %145 : vector<8x32xf32>
    %147 = math.tanh %146 : vector<8x32xf32>
    %148 = arith.mulf %143, %147 : vector<8x32xf32>
    %149 = vector.extract_strided_slice %12 {offsets = [7, 0, 0], sizes = [1, 8, 128], strides = [1, 1, 1]} : vector<8x8x128xf32> to vector<1x8x128xf32>
    %150 = vector.shape_cast %149 : vector<1x8x128xf32> to vector<8x128xf32>
    %cst_23 = arith.constant dense<0.000000e+00> : vector<8x128xf32>
    %151 = tpu.matmul %148, %13, %cst_23 {dimension_numbers = #tpu.dot_dimension_numbers<[1], [0], [0], [1], [0, 0, 1, 1], [], []>} : vector<8x32xf32>, vector<32x128xf32>, vector<8x128xf32> -> vector<8x128xf32>
    %152 = arith.addf %150, %151 : vector<8x128xf32>
    %153 = arith.negf %152 : vector<8x128xf32>
    %154 = math.exp %153 : vector<8x128xf32>
    %cst_24 = arith.constant 1.000000e+00 : f32
    %155 = vector.broadcast %cst_24 : f32 to vector<8x128xf32>
    %156 = arith.addf %155, %154 : vector<8x128xf32>
    %157 = arith.divf %155, %156 : vector<8x128xf32>
    %158 = math.tanh %152 : vector<8x128xf32>
    %159 = vector.extract_strided_slice %157 {offsets = [0, 0], sizes = [8, 32], strides = [1, 1]} : vector<8x128xf32> to vector<8x32xf32>
    %160 = vector.extract_strided_slice %157 {offsets = [0, 32], sizes = [8, 32], strides = [1, 1]} : vector<8x128xf32> to vector<8x32xf32>
    %161 = vector.extract_strided_slice %158 {offsets = [0, 64], sizes = [8, 32], strides = [1, 1]} : vector<8x128xf32> to vector<8x32xf32>
    %162 = vector.extract_strided_slice %157 {offsets = [0, 96], sizes = [8, 32], strides = [1, 1]} : vector<8x128xf32> to vector<8x32xf32>
    %163 = arith.mulf %160, %146 : vector<8x32xf32>
    %164 = arith.mulf %159, %161 : vector<8x32xf32>
    %165 = arith.addf %163, %164 : vector<8x32xf32>
    %166 = math.tanh %165 : vector<8x32xf32>
    %167 = arith.mulf %162, %166 : vector<8x32xf32>
    %168 = vector.shape_cast %34 : vector<8x32xf32> to vector<1x8x32xf32>
    %169 = vector.shape_cast %53 : vector<8x32xf32> to vector<1x8x32xf32>
    %170 = vector.shape_cast %72 : vector<8x32xf32> to vector<1x8x32xf32>
    %171 = vector.shape_cast %91 : vector<8x32xf32> to vector<1x8x32xf32>
    %172 = vector.shape_cast %110 : vector<8x32xf32> to vector<1x8x32xf32>
    %173 = vector.shape_cast %129 : vector<8x32xf32> to vector<1x8x32xf32>
    %174 = vector.shape_cast %148 : vector<8x32xf32> to vector<1x8x32xf32>
    %175 = vector.shape_cast %167 : vector<8x32xf32> to vector<1x8x32xf32>
    %176 = tpu.concatenate %168, %169, %170, %171, %172, %173, %174, %175 in 0 : vector<1x8x32xf32>, vector<1x8x32xf32>, vector<1x8x32xf32>, vector<1x8x32xf32>, vector<1x8x32xf32>, vector<1x8x32xf32>, vector<1x8x32xf32>, vector<1x8x32xf32> -> vector<8x8x32xf32>
    %177 = vector.shape_cast %167 : vector<8x32xf32> to vector<1x8x32xf32>
    %178 = vector.broadcast %177 : vector<1x8x32xf32> to vector<8x8x32xf32>
    %179 = arith.mulf %176, %178 : vector<8x8x32xf32>
    %cst_25 = arith.constant dense<0.000000e+00> : vector<8x8xf32>
    %180 = vector.multi_reduction <add>, %179, %cst_25 [2] : vector<8x8x32xf32> to vector<8x8xf32>
    %181 = vector.shape_cast %180 : vector<8x8xf32> to vector<8x8x1xf32>
    %cst_26 = arith.constant dense<0xFF800000> : vector<8x1xf32>
    %182 = vector.multi_reduction <maximumf>, %181, %cst_26 [0] : vector<8x8x1xf32> to vector<8x1xf32>
    %183 = vector.shape_cast %182 : vector<8x1xf32> to vector<1x8x1xf32>
    %184 = vector.broadcast %183 : vector<1x8x1xf32> to vector<8x8x1xf32>
    %185 = arith.subf %181, %184 : vector<8x8x1xf32>
    %186 = math.exp %185 : vector<8x8x1xf32>
    %cst_27 = arith.constant dense<0.000000e+00> : vector<8x1xf32>
    %187 = vector.multi_reduction <add>, %186, %cst_27 [0] : vector<8x8x1xf32> to vector<8x1xf32>
    %188 = vector.shape_cast %187 : vector<8x1xf32> to vector<1x8x1xf32>
    %189 = vector.broadcast %188 : vector<1x8x1xf32> to vector<8x8x1xf32>
    %190 = arith.divf %186, %189 : vector<8x8x1xf32>
    %191 = vector.broadcast %190 : vector<8x8x1xf32> to vector<8x8x32xf32>
    %192 = arith.mulf %191, %176 : vector<8x8x32xf32>
    %cst_28 = arith.constant dense<0.000000e+00> : vector<8x32xf32>
    %193 = vector.multi_reduction <add>, %192, %cst_28 [0] : vector<8x8x32xf32> to vector<8x32xf32>
    %c96 = arith.constant 96 : index
    %c0_29 = arith.constant 0 : index
    %194 = vector.load %arg1[%c96, %c0_29] : memref<152x128xf32, #tpu.memory_space<vmem>>, vector<32x128xf32>
    %cst_30 = arith.constant dense<0.000000e+00> : vector<8x128xf32>
    %195 = tpu.matmul %193, %194, %cst_30 {dimension_numbers = #tpu.dot_dimension_numbers<[1], [0], [0], [1], [0, 0, 1, 1], [], []>} : vector<8x32xf32>, vector<32x128xf32>, vector<8x128xf32> -> vector<8x128xf32>
    %c144 = arith.constant 144 : index
    %c0_31 = arith.constant 0 : index
    %196 = vector.load %arg1[%c144, %c0_31] : memref<152x128xf32, #tpu.memory_space<vmem>>, vector<1x128xf32>
    %197 = vector.broadcast %196 : vector<1x128xf32> to vector<8x128xf32>
    %198 = arith.addf %195, %197 : vector<8x128xf32>
    %c64 = arith.constant 64 : index
    %c0_32 = arith.constant 0 : index
    %199 = vector.load %arg0[%c64, %c0_32] : memref<160x1xi32, #tpu.memory_space<vmem>>, vector<96x1xi32>
    %200 = tpu.iota {dimensions = array<i32: 1>} : vector<96x32xi32>
    %201 = vector.broadcast %199 : vector<96x1xi32> to vector<96x32xi32>
    %202 = arith.cmpi eq, %201, %200 : vector<96x32xi32>
    %cst_33 = arith.constant 1.000000e+00 : f32
    %cst_34 = arith.constant 0.000000e+00 : f32
    %203 = vector.broadcast %cst_33 : f32 to vector<96x32xf32>
    %204 = vector.broadcast %cst_34 : f32 to vector<96x32xf32>
    %205 = arith.select %202, %203, %204 : vector<96x32xi1>, vector<96x32xf32>
    %c0_35 = arith.constant 0 : index
    %c0_36 = arith.constant 0 : index
    %206 = vector.load %arg2[%c0_35, %c0_36] : memref<128x16xf32, #tpu.memory_space<vmem>>, vector<32x16xf32>
    %cst_37 = arith.constant dense<0.000000e+00> : vector<96x16xf32>
    %207 = tpu.matmul %205, %206, %cst_37 {dimension_numbers = #tpu.dot_dimension_numbers<[1], [0], [0], [1], [0, 0, 1, 1], [], []>} : vector<96x32xf32>, vector<32x16xf32>, vector<96x16xf32> -> vector<96x16xf32>
    %208 = vector.shape_cast %207 : vector<96x16xf32> to vector<12x8x16xf32>
    %209 = vector.extract_strided_slice %208 {offsets = [0, 0, 0], sizes = [10, 8, 16], strides = [1, 1, 1]} : vector<12x8x16xf32> to vector<10x8x16xf32>
    %210 = vector.shape_cast %209 : vector<10x8x16xf32> to vector<80x16xf32>
    %c32 = arith.constant 32 : index
    %c0_38 = arith.constant 0 : index
    %211 = vector.load %arg2[%c32, %c0_38] : memref<128x16xf32, #tpu.memory_space<vmem>>, vector<16x16xf32>
    %cst_39 = arith.constant dense<0.000000e+00> : vector<80x16xf32>
    %212 = tpu.matmul %210, %211, %cst_39 {dimension_numbers = #tpu.dot_dimension_numbers<[1], [0], [0], [1], [0, 0, 1, 1], [], []>} : vector<80x16xf32>, vector<16x16xf32>, vector<80x16xf32> -> vector<80x16xf32>
    %213 = vector.extract_strided_slice %208 {offsets = [1, 0, 0], sizes = [10, 8, 16], strides = [1, 1, 1]} : vector<12x8x16xf32> to vector<10x8x16xf32>
    %214 = vector.shape_cast %213 : vector<10x8x16xf32> to vector<80x16xf32>
    %c48 = arith.constant 48 : index
    %c0_40 = arith.constant 0 : index
    %215 = vector.load %arg2[%c48, %c0_40] : memref<128x16xf32, #tpu.memory_space<vmem>>, vector<16x16xf32>
    %cst_41 = arith.constant dense<0.000000e+00> : vector<80x16xf32>
    %216 = tpu.matmul %214, %215, %cst_41 {dimension_numbers = #tpu.dot_dimension_numbers<[1], [0], [0], [1], [0, 0, 1, 1], [], []>} : vector<80x16xf32>, vector<16x16xf32>, vector<80x16xf32> -> vector<80x16xf32>
    %217 = arith.addf %212, %216 : vector<80x16xf32>
    %218 = vector.extract_strided_slice %208 {offsets = [2, 0, 0], sizes = [10, 8, 16], strides = [1, 1, 1]} : vector<12x8x16xf32> to vector<10x8x16xf32>
    %219 = vector.shape_cast %218 : vector<10x8x16xf32> to vector<80x16xf32>
    %c64_42 = arith.constant 64 : index
    %c0_43 = arith.constant 0 : index
    %220 = vector.load %arg2[%c64_42, %c0_43] : memref<128x16xf32, #tpu.memory_space<vmem>>, vector<16x16xf32>
    %cst_44 = arith.constant dense<0.000000e+00> : vector<80x16xf32>
    %221 = tpu.matmul %219, %220, %cst_44 {dimension_numbers = #tpu.dot_dimension_numbers<[1], [0], [0], [1], [0, 0, 1, 1], [], []>} : vector<80x16xf32>, vector<16x16xf32>, vector<80x16xf32> -> vector<80x16xf32>
    %222 = arith.addf %217, %221 : vector<80x16xf32>
    %c112 = arith.constant 112 : index
    %c0_45 = arith.constant 0 : index
    %223 = vector.load %arg2[%c112, %c0_45] : memref<128x16xf32, #tpu.memory_space<vmem>>, vector<1x16xf32>
    %224 = vector.broadcast %223 : vector<1x16xf32> to vector<80x16xf32>
    %225 = arith.addf %222, %224 : vector<80x16xf32>
    %cst_46 = arith.constant 0.000000e+00 : f32
    %226 = vector.broadcast %cst_46 : f32 to vector<80x16xf32>
    %227 = arith.maximumf %225, %226 : vector<80x16xf32>
    %228 = vector.shape_cast %227 : vector<80x16xf32> to vector<10x8x16xf32>
    %cst_47 = arith.constant dense<0xFF800000> : vector<8x16xf32>
    %229 = vector.multi_reduction <maximumf>, %228, %cst_47 [0] : vector<10x8x16xf32> to vector<8x16xf32>
    %230 = vector.extract_strided_slice %208 {offsets = [10, 0, 0], sizes = [1, 8, 16], strides = [1, 1, 1]} : vector<12x8x16xf32> to vector<1x8x16xf32>
    %231 = vector.shape_cast %230 : vector<1x8x16xf32> to vector<8x16xf32>
    %c80 = arith.constant 80 : index
    %c0_48 = arith.constant 0 : index
    %232 = vector.load %arg2[%c80, %c0_48] : memref<128x16xf32, #tpu.memory_space<vmem>>, vector<16x16xf32>
    %cst_49 = arith.constant dense<0.000000e+00> : vector<8x16xf32>
    %233 = tpu.matmul %231, %232, %cst_49 {dimension_numbers = #tpu.dot_dimension_numbers<[1], [0], [0], [1], [0, 0, 1, 1], [], []>} : vector<8x16xf32>, vector<16x16xf32>, vector<8x16xf32> -> vector<8x16xf32>
    %234 = vector.extract_strided_slice %208 {offsets = [11, 0, 0], sizes = [1, 8, 16], strides = [1, 1, 1]} : vector<12x8x16xf32> to vector<1x8x16xf32>
    %235 = vector.shape_cast %234 : vector<1x8x16xf32> to vector<8x16xf32>
    %c96_50 = arith.constant 96 : index
    %c0_51 = arith.constant 0 : index
    %236 = vector.load %arg2[%c96_50, %c0_51] : memref<128x16xf32, #tpu.memory_space<vmem>>, vector<16x16xf32>
    %cst_52 = arith.constant dense<0.000000e+00> : vector<8x16xf32>
    %237 = tpu.matmul %235, %236, %cst_52 {dimension_numbers = #tpu.dot_dimension_numbers<[1], [0], [0], [1], [0, 0, 1, 1], [], []>} : vector<8x16xf32>, vector<16x16xf32>, vector<8x16xf32> -> vector<8x16xf32>
    %238 = arith.addf %233, %237 : vector<8x16xf32>
    %c120 = arith.constant 120 : index
    %c0_53 = arith.constant 0 : index
    %239 = vector.load %arg2[%c120, %c0_53] : memref<128x16xf32, #tpu.memory_space<vmem>>, vector<1x16xf32>
    %240 = vector.broadcast %239 : vector<1x16xf32> to vector<8x16xf32>
    %241 = arith.addf %238, %240 : vector<8x16xf32>
    %cst_54 = arith.constant 0.000000e+00 : f32
    %242 = vector.broadcast %cst_54 : f32 to vector<8x16xf32>
    %243 = arith.maximumf %241, %242 : vector<8x16xf32>
    %244 = arith.maximumf %229, %243 : vector<8x16xf32>
    %c128 = arith.constant 128 : index
    %c0_55 = arith.constant 0 : index
    %245 = vector.load %arg1[%c128, %c0_55] : memref<152x128xf32, #tpu.memory_space<vmem>>, vector<16x128xf32>
    %cst_56 = arith.constant dense<0.000000e+00> : vector<8x128xf32>
    %246 = tpu.matmul %244, %245, %cst_56 {dimension_numbers = #tpu.dot_dimension_numbers<[1], [0], [0], [1], [0, 0, 1, 1], [], []>} : vector<8x16xf32>, vector<16x128xf32>, vector<8x128xf32> -> vector<8x128xf32>
    %247 = arith.addf %198, %246 : vector<8x128xf32>
    %c0_57 = arith.constant 0 : index
    %c0_58 = arith.constant 0 : index
    %248 = vector.load %arg3[%c0_57, %c0_58] : memref<8x128xf32, #tpu.memory_space<vmem>>, vector<8x128xf32>
    tpu.vector_store %arg3[%c0_57, %c0_58], %247 {strides = array<i32>} : memref<8x128xf32, #tpu.memory_space<vmem>>, vector<8x128xf32>,
    return
  }
}

</mosaic_0001>

<llo_original>
// kernel: forward.1
$region0: #{forward.1}
  #allocation0 [shape = 'u32[]', space=smem, size = 0x4, offset = 0x4, fixed_abs, tag = 'smem constant byte address 0x4 - core index']
  #allocation1 [shape = 'u32[144,128]{1,0:T(1,128)}', space=vmem, size = 0x12000, scoped, tag = 'internal scratch']
  %s0 = inlined_call_operand.vmem [shape: s32[160,1], index: 0, kind: input, shape index: {}]
  %s1 = inlined_call_operand.vmem [shape: f32[152,128], index: 1, kind: input, shape index: {}]
  %s2 = inlined_call_operand.vmem [shape: f32[128,16], index: 2, kind: input, shape index: {}]
  %s3 = inlined_call_operand.vmem [shape: f32[8,128], index: 3, kind: output, shape index: {}]
  %s4 = sld [smem:[#allocation0]]
  $region22: #{forward.1} parent=0
    _
  %s6 = ssub.s32 1, %s4
  %s7 = scalar_select 0, %s6, %s4
  // Predicated region
  $region2: #{forward.1} parent=0 // pred_check
    _
  $region3: #{forward.1} parent=0 // pred_check_branch
    %9 = sbr.rel (0) target = $region5
  $region4: #{forward.1} parent=0 // pred_region
    _
  $region5: #{forward.1} parent=0 // pred_fallthru
    _
  // Predicated region
  $region6: #{forward.1} parent=0 // pred_check
    _
  $region7: #{forward.1} parent=0 // pred_check_branch
    %11 = sbr.rel (0) target = $region9
  $region8: #{forward.1} parent=0 // pred_region
    _
  $region9: #{forward.1} parent=0 // pred_fallthru
    _
  // Predicated region
  $region10: #{forward.1} parent=0 // pred_check
    _
  $region11: #{forward.1} parent=0 // pred_check_branch
    %13 = sbr.rel (0) target = $region13
  $region12: #{forward.1} parent=0 // pred_region
    _
  $region13: #{forward.1} parent=0 // pred_fallthru
    _
  %v14 = vld [vmem:[%s0] sm:$0xff]
  %v15 = vld [vmem:[%s0 + $0x8] sm:$0xff]
  %v16 = vld [vmem:[%s0 + $0x10] sm:$0xff]
  %v17 = vld [vmem:[%s0 + $0x18] sm:$0xff]
  %v18 = vld [vmem:[%s0 + $0x20] sm:$0xff]
  %v19 = vld [vmem:[%s0 + $0x28] sm:$0xff]
  %v20 = vld [vmem:[%s0 + $0x30] sm:$0xff]
  %v21 = vld [vmem:[%s0 + $0x38] sm:$0xff]
  %v22 = vlaneseq
  %v23 = vand.u32 %v22, 127
  %24 = vset.pattern.permute.xlu0 0
  %25 = vperm.xlu0 %24, %v14
  %v26 = vpop.permute.xlu0 %25
  %27 = vset.pattern.permute.xlu0 0
  %28 = vperm.xlu0 %27, %v15
  %v29 = vpop.permute.xlu0 %28
  %30 = vset.pattern.permute.xlu0 0
  %31 = vperm.xlu0 %30, %v16
  %v32 = vpop.permute.xlu0 %31
  %33 = vset.pattern.permute.xlu0 0
  %34 = vperm.xlu0 %33, %v17
  %v35 = vpop.permute.xlu0 %34
  %36 = vset.pattern.permute.xlu0 0
  %37 = vperm.xlu0 %36, %v18
  %v38 = vpop.permute.xlu0 %37
  %39 = vset.pattern.permute.xlu0 0
  %40 = vperm.xlu0 %39, %v19
  %v41 = vpop.permute.xlu0 %40
  %42 = vset.pattern.permute.xlu0 0
  %43 = vperm.xlu0 %42, %v20
  %v44 = vpop.permute.xlu0 %43
  %45 = vset.pattern.permute.xlu0 0
  %46 = vperm.xlu0 %45, %v21
  %v47 = vpop.permute.xlu0 %46
  %vm48 = vcmp.eq.s32.totalorder %v26, %v23
  %vm49 = vcmp.eq.s32.totalorder %v29, %v23
  %vm50 = vcmp.eq.s32.totalorder %v32, %v23
  %vm51 = vcmp.eq.s32.totalorder %v35, %v23
  %vm52 = vcmp.eq.s32.totalorder %v38, %v23
  %vm53 = vcmp.eq.s32.totalorder %v41, %v23
  %vm54 = vcmp.eq.s32.totalorder %v44, %v23
  %vm55 = vcmp.eq.s32.totalorder %v47, %v23
  %v56 = vsel %vm48, 1.0, 0.0
  %v57 = vsel %vm49, 1.0, 0.0
  %v58 = vsel %vm50, 1.0, 0.0
  %v59 = vsel %vm51, 1.0, 0.0
  %v60 = vsel %vm52, 1.0, 0.0
  %v61 = vsel %vm53, 1.0, 0.0
  %v62 = vsel %vm54, 1.0, 0.0
  %v63 = vsel %vm55, 1.0, 0.0
  %v64 = vld [vmem:[%s1] sm:$0xff]
  %v65 = vld [vmem:[%s1 + $0x8] sm:$0xff]
  %v66 = vld [vmem:[%s1 + $0x10] sm:$0xff]
  %v67 = vld [vmem:[%s1 + $0x18] sm:$0xff]
  %v68 = vld [vmem:[%s1 + $0x20] sm:$0xff]
  %v69 = vld [vmem:[%s1 + $0x28] sm:$0xff]
  %v70 = vld [vmem:[%s1 + $0x30] sm:$0xff]
  %v71 = vld [vmem:[%s1 + $0x58] sm:$0x1]
  %v72 = vlaneseq
  %v73 = vshrl.u32 %v72, 7
  %v74 = vsub.s32 0, %v73
  %v75 = vrot.slane %v71, %v74
  %vm76 = vcmask 457728
  %v78 = vsel %vm76, %v56, 0
  %v81 = vsel %vm76, %v57, 0
  %v84 = vsel %vm76, %v58, 0
  %v87 = vsel %vm76, %v59, 0
  %v90 = vsel %vm76, %v60, 0
  %v93 = vsel %vm76, %v61, 0
  %v96 = vsel %vm76, %v62, 0
  %v99 = vsel %vm76, %v63, 0
  %101 = vmatprep.subr.mxu0 0.0
  %102 = vmatpush1.msra.mxu0 0.0
  %103 = vmatprep.subr.mxu0 0.0
  %104 = vmatpush1.msra.mxu0 0.0
  %105 = vmatprep.subr.mxu0 0.0
  %106 = vmatpush1.msra.mxu0 0.0
  %107 = vmatprep.subr.mxu0 0.0
  %108 = vmatpush1.msra.mxu0 0.0
  %109 = vmatprep.subr.mxu0 0.0
  %110 = vmatpush1.msra.mxu0 0.0
  %111 = vmatprep.subr.mxu0 0.0
  %112 = vmatpush1.msra.mxu0 0.0
  %113 = vmatprep.subr.mxu0 0.0
  %114 = vmatpush1.msra.mxu0 0.0
  %115 = vmatprep.subr.mxu0 0.0
  %116 = vmatpush1.msra.mxu0 0.0
  %117 = vmatprep.subr.mxu0 0.0
  %118 = vmatpush1.msra.mxu0 0.0
  %119 = vmatprep.subr.mxu0 0.0
  %120 = vmatpush1.msra.mxu0 %v70
  %121 = vmatprep.subr.mxu0 0.0
  %122 = vmatpush1.msra.mxu0 %v69
  %123 = vmatprep.subr.mxu0 0.0
  %124 = vmatpush1.msra.mxu0 %v68
  %125 = vmatprep.subr.mxu0 0.0
  %126 = vmatpush1.msra.mxu0 %v67
  %127 = vmatprep.subr.mxu0 0.0
  %128 = vmatpush1.msra.mxu0 %v66
  %129 = vmatprep.subr.mxu0 0.0
  %130 = vmatpush1.msra.mxu0 %v65
  %131 = vmatprep.subr.mxu0 0.0
  %132 = vmatpush1.msra.mxu0 %v64
  %133 = vmatprep.subr.mxu0 0.0
  %134 = vmatpush2.msra.mxu0 0.0
  %135 = vmatprep.subr.mxu0 0.0
  %136 = vmatpush2.msra.mxu0 0.0
  %137 = vmatprep.subr.mxu0 0.0
  %138 = vmatpush2.msra.mxu0 0.0
  %139 = vmatprep.subr.mxu0 0.0
  %140 = vmatpush2.msra.mxu0 0.0
  %141 = vmatprep.subr.mxu0 0.0
  %142 = vmatpush2.msra.mxu0 0.0
  %143 = vmatprep.subr.mxu0 0.0
  %144 = vmatpush2.msra.mxu0 0.0
  %145 = vmatprep.subr.mxu0 0.0
  %146 = vmatpush2.msra.mxu0 0.0
  %147 = vmatprep.subr.mxu0 0.0
  %148 = vmatpush2.msra.mxu0 0.0
  %149 = vmatprep.subr.mxu0 0.0
  %150 = vmatpush2.msra.mxu0 0.0
  %151 = vmatprep.subr.mxu0 0.0
  %152 = vmatpush2.msra.mxu0 0.0
  %153 = vmatprep.subr.mxu0 0.0
  %154 = vmatpush2.msra.mxu0 0.0
  %155 = vmatprep.subr.mxu0 0.0
  %156 = vmatpush2.msra.mxu0 0.0
  %157 = vmatprep.subr.mxu0 0.0
  %158 = vmatpush2.msra.mxu0 0.0
  %159 = vmatprep.subr.mxu0 0.0
  %160 = vmatpush2.msra.mxu0 0.0
  %161 = vmatprep.subr.mxu0 0.0
  %162 = vmatpush2.msra.mxu0 0.0
  %163 = vmatprep.subr.mxu0 0.0
  %164 = vmatpush2.msra.mxu0 0.0
  %165 = vmatprep.mubr.f32.mxu0 0.0
  %166 = vmatmul.mubr.f32.gmra.mxu0 %v78
  %v167 = vpop.f32.mrf.mxu0
  %v168 = vadd.f32 %v75, %v167
  %v169 = vpop.f32.mrf.mxu0
  %170 = vmatprep.mubr.f32.mxu0 0.0
  %171 = vmatmul.mubr.f32.gmra.mxu0 %v81
  %v172 = vpop.f32.mrf.mxu0
  %v173 = vadd.f32 %v75, %v172
  %v174 = vpop.f32.mrf.mxu0
  %175 = vmatprep.mubr.f32.mxu0 0.0
  %176 = vmatmul.mubr.f32.gmra.mxu0 %v84
  %v177 = vpop.f32.mrf.mxu0
  %v178 = vadd.f32 %v75, %v177
  %v179 = vpop.f32.mrf.mxu0
  %180 = vmatprep.mubr.f32.mxu0 0.0
  %181 = vmatmul.mubr.f32.gmra.mxu0 %v87
  %v182 = vpop.f32.mrf.mxu0
  %v183 = vadd.f32 %v75, %v182
  %v184 = vpop.f32.mrf.mxu0
  %185 = vmatprep.mubr.f32.mxu0 0.0
  %186 = vmatmul.mubr.f32.gmra.mxu0 %v90
  %v187 = vpop.f32.mrf.mxu0
  %v188 = vadd.f32 %v75, %v187
  %v189 = vpop.f32.mrf.mxu0
  %190 = vmatprep.mubr.f32.mxu0 0.0
  %191 = vmatmul.mubr.f32.gmra.mxu0 %v93
  %v192 = vpop.f32.mrf.mxu0
  %v193 = vadd.f32 %v75, %v192
  %v194 = vpop.f32.mrf.mxu0
  %195 = vmatprep.mubr.f32.mxu0 0.0
  %196 = vmatmul.mubr.f32.gmra.mxu0 %v96
  %v197 = vpop.f32.mrf.mxu0
  %v198 = vadd.f32 %v75, %v197
  %v199 = vpop.f32.mrf.mxu0
  %200 = vmatprep.mubr.f32.mxu0 0.0
  %201 = vmatmul.mubr.f32.gmra.mxu0 %v99
  %v202 = vpop.f32.mrf.mxu0
  %v203 = vadd.f32 %v75, %v202
  %v204 = vpop.f32.mrf.mxu0
  %205 = vdwg.mxu0
  %v206 = vld [vmem:[%s1 + $0x38] sm:$0xff]
  %v207 = vld [vmem:[%s1 + $0x40] sm:$0xff]
  %v208 = vld [vmem:[%s1 + $0x48] sm:$0xff]
  %v209 = vld [vmem:[%s1 + $0x50] sm:$0xff]
  %vm210 = vcmask 261120
  %v212 = vsel %vm210, 0.0, 0
  %214 = vmatprep.subr.mxu0 0.0
  %215 = vmatpush1.msra.mxu0 0.0
  %216 = vmatprep.subr.mxu0 0.0
  %217 = vmatpush1.msra.mxu0 0.0
  %218 = vmatprep.subr.mxu0 0.0
  %219 = vmatpush1.msra.mxu0 0.0
  %220 = vmatprep.subr.mxu0 0.0
  %221 = vmatpush1.msra.mxu0 0.0
  %222 = vmatprep.subr.mxu0 0.0
  %223 = vmatpush1.msra.mxu0 0.0
  %224 = vmatprep.subr.mxu0 0.0
  %225 = vmatpush1.msra.mxu0 0.0
  %226 = vmatprep.subr.mxu0 0.0
  %227 = vmatpush1.msra.mxu0 0.0
  %228 = vmatprep.subr.mxu0 0.0
  %229 = vmatpush1.msra.mxu0 0.0
  %230 = vmatprep.subr.mxu0 0.0
  %231 = vmatpush1.msra.mxu0 0.0
  %232 = vmatprep.subr.mxu0 0.0
  %233 = vmatpush1.msra.mxu0 0.0
  %234 = vmatprep.subr.mxu0 0.0
  %235 = vmatpush1.msra.mxu0 0.0
  %236 = vmatprep.subr.mxu0 0.0
  %237 = vmatpush1.msra.mxu0 0.0
  %238 = vmatprep.subr.mxu0 0.0
  %239 = vmatpush1.msra.mxu0 %v209
  %240 = vmatprep.subr.mxu0 0.0
  %241 = vmatpush1.msra.mxu0 %v208
  %242 = vmatprep.subr.mxu0 0.0
  %243 = vmatpush1.msra.mxu0 %v207
  %244 = vmatprep.subr.mxu0 0.0
  %245 = vmatpush1.msra.mxu0 %v206
  %246 = vmatprep.subr.mxu0 0.0
  %247 = vmatpush2.msra.mxu0 0.0
  %248 = vmatprep.subr.mxu0 0.0
  %249 = vmatpush2.msra.mxu0 0.0
  %250 = vmatprep.subr.mxu0 0.0
  %251 = vmatpush2.msra.mxu0 0.0
  %252 = vmatprep.subr.mxu0 0.0
  %253 = vmatpush2.msra.mxu0 0.0
  %254 = vmatprep.subr.mxu0 0.0
  %255 = vmatpush2.msra.mxu0 0.0
  %256 = vmatprep.subr.mxu0 0.0
  %257 = vmatpush2.msra.mxu0 0.0
  %258 = vmatprep.subr.mxu0 0.0
  %259 = vmatpush2.msra.mxu0 0.0
  %260 = vmatprep.subr.mxu0 0.0
  %261 = vmatpush2.msra.mxu0 0.0
  %262 = vmatprep.subr.mxu0 0.0
  %263 = vmatpush2.msra.mxu0 0.0
  %264 = vmatprep.subr.mxu0 0.0
  %265 = vmatpush2.msra.mxu0 0.0
  %266 = vmatprep.subr.mxu0 0.0
  %267 = vmatpush2.msra.mxu0 0.0
  %268 = vmatprep.subr.mxu0 0.0
  %269 = vmatpush2.msra.mxu0 0.0
  %270 = vmatprep.subr.mxu0 0.0
  %271 = vmatpush2.msra.mxu0 0.0
  %272 = vmatprep.subr.mxu0 0.0
  %273 = vmatpush2.msra.mxu0 0.0
  %274 = vmatprep.subr.mxu0 0.0
  %275 = vmatpush2.msra.mxu0 0.0
  %276 = vmatprep.subr.mxu0 0.0
  %277 = vmatpush2.msra.mxu0 0.0
  %278 = vmatprep.mubr.f32.mxu0 0.0
  %279 = vmatmul.mubr.f32.gmra.mxu0 %v212
  %v280 = vpop.f32.mrf.mxu0
  %v281 = vadd.f32 0.0, %v280
  %v282 = vpop.f32.mrf.mxu0
  %283 = vdwg.mxu0
  %v284 = vadd.f32 %v168, %v281
  %v285 = vxor.u32 %v284, 2147483648
  %v286 = vmul.f32 %v285, 1.442695
  %v287 = vpow.pop %v286
  %v288 = vadd.f32 %v287, 1.0
  %v289 = vrcp.pop %v288
  %v290 = vmul.f32 1.0, %v289
  %v291 = vtanh.pop %v284
  %v292 = vmul.f32 %v290, 0.0
  %294 = vrot.lane.b32.xlu0 %v291, 64
  %v295 = vpop.permute.xlu0 %294
  %v297 = vmul.f32 %v290, %v295
  %299 = vrot.lane.b32.xlu0 %v297, 32
  %v300 = vpop.permute.xlu0 %299
  %v302 = vadd.f32 %v292, %v300
  %v303 = vtanh.pop %v302
  %305 = vrot.lane.b32.xlu0 %v303, 64
  %v306 = vpop.permute.xlu0 %305
  %v308 = vmul.f32 %v290, %v306
  %310 = vrot.lane.b32.xlu0 %v308, 32
  %v311 = vpop.permute.xlu0 %310
  %v312 = vsel %vm210, %v311, 0
  %314 = vmatprep.subr.mxu0 0.0
  %315 = vmatpush1.msra.mxu0 0.0
  %316 = vmatprep.subr.mxu0 0.0
  %317 = vmatpush1.msra.mxu0 0.0
  %318 = vmatprep.subr.mxu0 0.0
  %319 = vmatpush1.msra.mxu0 0.0
  %320 = vmatprep.subr.mxu0 0.0
  %321 = vmatpush1.msra.mxu0 0.0
  %322 = vmatprep.subr.mxu0 0.0
  %323 = vmatpush1.msra.mxu0 0.0
  %324 = vmatprep.subr.mxu0 0.0
  %325 = vmatpush1.msra.mxu0 0.0
  %326 = vmatprep.subr.mxu0 0.0
  %327 = vmatpush1.msra.mxu0 0.0
  %328 = vmatprep.subr.mxu0 0.0
  %329 = vmatpush1.msra.mxu0 0.0
  %330 = vmatprep.subr.mxu0 0.0
  %331 = vmatpush1.msra.mxu0 0.0
  %332 = vmatprep.subr.mxu0 0.0
  %333 = vmatpush1.msra.mxu0 0.0
  %334 = vmatprep.subr.mxu0 0.0
  %335 = vmatpush1.msra.mxu0 0.0
  %336 = vmatprep.subr.mxu0 0.0
  %337 = vmatpush1.msra.mxu0 0.0
  %338 = vmatprep.subr.mxu0 0.0
  %339 = vmatpush1.msra.mxu0 %v209
  %340 = vmatprep.subr.mxu0 0.0
  %341 = vmatpush1.msra.mxu0 %v208
  %342 = vmatprep.subr.mxu0 0.0
  %343 = vmatpush1.msra.mxu0 %v207
  %344 = vmatprep.subr.mxu0 0.0
  %345 = vmatpush1.msra.mxu0 %v206
  %346 = vmatprep.subr.mxu0 0.0
  %347 = vmatpush2.msra.mxu0 0.0
  %348 = vmatprep.subr.mxu0 0.0
  %349 = vmatpush2.msra.mxu0 0.0
  %350 = vmatprep.subr.mxu0 0.0
  %351 = vmatpush2.msra.mxu0 0.0
  %352 = vmatprep.subr.mxu0 0.0
  %353 = vmatpush2.msra.mxu0 0.0
  %354 = vmatprep.subr.mxu0 0.0
  %355 = vmatpush2.msra.mxu0 0.0
  %356 = vmatprep.subr.mxu0 0.0
  %357 = vmatpush2.msra.mxu0 0.0
  %358 = vmatprep.subr.mxu0 0.0
  %359 = vmatpush2.msra.mxu0 0.0
  %360 = vmatprep.subr.mxu0 0.0
  %361 = vmatpush2.msra.mxu0 0.0
  %362 = vmatprep.subr.mxu0 0.0
  %363 = vmatpush2.msra.mxu0 0.0
  %364 = vmatprep.subr.mxu0 0.0
  %365 = vmatpush2.msra.mxu0 0.0
  %366 = vmatprep.subr.mxu0 0.0
  %367 = vmatpush2.msra.mxu0 0.0
  %368 = vmatprep.subr.mxu0 0.0
  %369 = vmatpush2.msra.mxu0 0.0
  %370 = vmatprep.subr.mxu0 0.0
  %371 = vmatpush2.msra.mxu0 0.0
  %372 = vmatprep.subr.mxu0 0.0
  %373 = vmatpush2.msra.mxu0 0.0
  %374 = vmatprep.subr.mxu0 0.0
  %375 = vmatpush2.msra.mxu0 0.0
  %376 = vmatprep.subr.mxu0 0.0
  %377 = vmatpush2.msra.mxu0 0.0
  %378 = vmatprep.mubr.f32.mxu0 0.0
  %379 = vmatmul.mubr.f32.gmra.mxu0 %v312
  %v380 = vpop.f32.mrf.mxu0
  %v381 = vadd.f32 0.0, %v380
  %v382 = vpop.f32.mrf.mxu0
  %383 = vdwg.mxu0
  %v384 = vadd.f32 %v173, %v381
  %v385 = vxor.u32 %v384, 2147483648
  %v386 = vmul.f32 %v385, 1.442695
  %v387 = vpow.pop %v386
  %v388 = vadd.f32 %v387, 1.0
  %v389 = vrcp.pop %v388
  %v390 = vmul.f32 1.0, %v389
  %v391 = vtanh.pop %v384
  %v392 = vmul.f32 %v390, %v302
  %394 = vrot.lane.b32.xlu0 %v391, 64
  %v395 = vpop.permute.xlu0 %394
  %v397 = vmul.f32 %v390, %v395
  %399 = vrot.lane.b32.xlu0 %v397, 32
  %v400 = vpop.permute.xlu0 %399
  %v402 = vadd.f32 %v392, %v400
  %v403 = vtanh.pop %v402
  %405 = vrot.lane.b32.xlu0 %v403, 64
  %v406 = vpop.permute.xlu0 %405
  %v408 = vmul.f32 %v390, %v406
  %410 = vrot.lane.b32.xlu0 %v408, 32
  %v411 = vpop.permute.xlu0 %410
  %v412 = vsel %vm210, %v411, 0
  %414 = vmatprep.subr.mxu0 0.0
  %415 = vmatpush1.msra.mxu0 0.0
  %416 = vmatprep.subr.mxu0 0.0
  %417 = vmatpush1.msra.mxu0 0.0
  %418 = vmatprep.subr.mxu0 0.0
  %419 = vmatpush1.msra.mxu0 0.0
  %420 = vmatprep.subr.mxu0 0.0
  %421 = vmatpush1.msra.mxu0 0.0
  %422 = vmatprep.subr.mxu0 0.0
  %423 = vmatpush1.msra.mxu0 0.0
  %424 = vmatprep.subr.mxu0 0.0
  %425 = vmatpush1.msra.mxu0 0.0
  %426 = vmatprep.subr.mxu0 0.0
  %427 = vmatpush1.msra.mxu0 0.0
  %428 = vmatprep.subr.mxu0 0.0
  %429 = vmatpush1.msra.mxu0 0.0
  %430 = vmatprep.subr.mxu0 0.0
  %431 = vmatpush1.msra.mxu0 0.0
  %432 = vmatprep.subr.mxu0 0.0
  %433 = vmatpush1.msra.mxu0 0.0
  %434 = vmatprep.subr.mxu0 0.0
  %435 = vmatpush1.msra.mxu0 0.0
  %436 = vmatprep.subr.mxu0 0.0
  %437 = vmatpush1.msra.mxu0 0.0
  %438 = vmatprep.subr.mxu0 0.0
  %439 = vmatpush1.msra.mxu0 %v209
  %440 = vmatprep.subr.mxu0 0.0
  %441 = vmatpush1.msra.mxu0 %v208
  %442 = vmatprep.subr.mxu0 0.0
  %443 = vmatpush1.msra.mxu0 %v207
  %444 = vmatprep.subr.mxu0 0.0
  %445 = vmatpush1.msra.mxu0 %v206
  %446 = vmatprep.subr.mxu0 0.0
  %447 = vmatpush2.msra.mxu0 0.0
  %448 = vmatprep.subr.mxu0 0.0
  %449 = vmatpush2.msra.mxu0 0.0
  %450 = vmatprep.subr.mxu0 0.0
  %451 = vmatpush2.msra.mxu0 0.0
  %452 = vmatprep.subr.mxu0 0.0
  %453 = vmatpush2.msra.mxu0 0.0
  %454 = vmatprep.subr.mxu0 0.0
  %455 = vmatpush2.msra.mxu0 0.0
  %456 = vmatprep.subr.mxu0 0.0
  %457 = vmatpush2.msra.mxu0 0.0
  %458 = vmatprep.subr.mxu0 0.0
  %459 = vmatpush2.msra.mxu0 0.0
  %460 = vmatprep.subr.mxu0 0.0
  %461 = vmatpush2.msra.mxu0 0.0
  %462 = vmatprep.subr.mxu0 0.0
  %463 = vmatpush2.msra.mxu0 0.0
  %464 = vmatprep.subr.mxu0 0.0
  %465 = vmatpush2.msra.mxu0 0.0
  %466 = vmatprep.subr.mxu0 0.0
  %467 = vmatpush2.msra.mxu0 0.0
  %468 = vmatprep.subr.mxu0 0.0
  %469 = vmatpush2.msra.mxu0 0.0
  %470 = vmatprep.subr.mxu0 0.0
  %471 = vmatpush2.msra.mxu0 0.0
  %472 = vmatprep.subr.mxu0 0.0
  %473 = vmatpush2.msra.mxu0 0.0
  %474 = vmatprep.subr.mxu0 0.0
  %475 = vmatpush2.msra.mxu0 0.0
  %476 = vmatprep.subr.mxu0 0.0
  %477 = vmatpush2.msra.mxu0 0.0
  %478 = vmatprep.mubr.f32.mxu0 0.0
  %479 = vmatmul.mubr.f32.gmra.mxu0 %v412
  %v480 = vpop.f32.mrf.mxu0
  %v481 = vadd.f32 0.0, %v480
  %v482 = vpop.f32.mrf.mxu0
  %483 = vdwg.mxu0
  %v484 = vadd.f32 %v178, %v481
  %v485 = vxor.u32 %v484, 2147483648
  %v486 = vmul.f32 %v485, 1.442695
  %v487 = vpow.pop %v486
  %v488 = vadd.f32 %v487, 1.0
  %v489 = vrcp.pop %v488
  %v490 = vmul.f32 1.0, %v489
  %v491 = vtanh.pop %v484
  %v492 = vmul.f32 %v490, %v402
  %494 = vrot.lane.b32.xlu0 %v491, 64
  %v495 = vpop.permute.xlu0 %494
  %v497 = vmul.f32 %v490, %v495
  %499 = vrot.lane.b32.xlu0 %v497, 32
  %v500 = vpop.permute.xlu0 %499
  %v502 = vadd.f32 %v492, %v500
  %v503 = vtanh.pop %v502
  %505 = vrot.lane.b32.xlu0 %v503, 64
  %v506 = vpop.permute.xlu0 %505
  %v508 = vmul.f32 %v490, %v506
  %510 = vrot.lane.b32.xlu0 %v508, 32
  %v511 = vpop.permute.xlu0 %510
  %v512 = vsel %vm210, %v511, 0
  %514 = vmatprep.subr.mxu0 0.0
  %515 = vmatpush1.msra.mxu0 0.0
  %516 = vmatprep.subr.mxu0 0.0
  %517 = vmatpush1.msra.mxu0 0.0
  %518 = vmatprep.subr.mxu0 0.0
  %519 = vmatpush1.msra.mxu0 0.0
  %520 = vmatprep.subr.mxu0 0.0
  %521 = vmatpush1.msra.mxu0 0.0
  %522 = vmatprep.subr.mxu0 0.0
  %523 = vmatpush1.msra.mxu0 0.0
  %524 = vmatprep.subr.mxu0 0.0
  %525 = vmatpush1.msra.mxu0 0.0
  %526 = vmatprep.subr.mxu0 0.0
  %527 = vmatpush1.msra.mxu0 0.0
  %528 = vmatprep.subr.mxu0 0.0
  %529 = vmatpush1.msra.mxu0 0.0
  %530 = vmatprep.subr.mxu0 0.0
  %531 = vmatpush1.msra.mxu0 0.0
  %532 = vmatprep.subr.mxu0 0.0
  %533 = vmatpush1.msra.mxu0 0.0
  %534 = vmatprep.subr.mxu0 0.0
  %535 = vmatpush1.msra.mxu0 0.0
  %536 = vmatprep.subr.mxu0 0.0
  %537 = vmatpush1.msra.mxu0 0.0
  %538 = vmatprep.subr.mxu0 0.0
  %539 = vmatpush1.msra.mxu0 %v209
  %540 = vmatprep.subr.mxu0 0.0
  %541 = vmatpush1.msra.mxu0 %v208
  %542 = vmatprep.subr.mxu0 0.0
  %543 = vmatpush1.msra.mxu0 %v207
  %544 = vmatprep.subr.mxu0 0.0
  %545 = vmatpush1.msra.mxu0 %v206
  %546 = vmatprep.subr.mxu0 0.0
  %547 = vmatpush2.msra.mxu0 0.0
  %548 = vmatprep.subr.mxu0 0.0
  %549 = vmatpush2.msra.mxu0 0.0
  %550 = vmatprep.subr.mxu0 0.0
  %551 = vmatpush2.msra.mxu0 0.0
  %552 = vmatprep.subr.mxu0 0.0
  %553 = vmatpush2.msra.mxu0 0.0
  %554 = vmatprep.subr.mxu0 0.0
  %555 = vmatpush2.msra.mxu0 0.0
  %556 = vmatprep.subr.mxu0 0.0
  %557 = vmatpush2.msra.mxu0 0.0
  %558 = vmatprep.subr.mxu0 0.0
  %559 = vmatpush2.msra.mxu0 0.0
  %560 = vmatprep.subr.mxu0 0.0
  %561 = vmatpush2.msra.mxu0 0.0
  %562 = vmatprep.subr.mxu0 0.0
  %563 = vmatpush2.msra.mxu0 0.0
  %564 = vmatprep.subr.mxu0 0.0
  %565 = vmatpush2.msra.mxu0 0.0
  %566 = vmatprep.subr.mxu0 0.0
  %567 = vmatpush2.msra.mxu0 0.0
  %568 = vmatprep.subr.mxu0 0.0
  %569 = vmatpush2.msra.mxu0 0.0
  %570 = vmatprep.subr.mxu0 0.0
  %571 = vmatpush2.msra.mxu0 0.0
  %572 = vmatprep.subr.mxu0 0.0
  %573 = vmatpush2.msra.mxu0 0.0
  %574 = vmatprep.subr.mxu0 0.0
  %575 = vmatpush2.msra.mxu0 0.0
  %576 = vmatprep.subr.mxu0 0.0
  %577 = vmatpush2.msra.mxu0 0.0
  %578 = vmatprep.mubr.f32.mxu0 0.0
  %579 = vmatmul.mubr.f32.gmra.mxu0 %v512
  %v580 = vpop.f32.mrf.mxu0
  %v581 = vadd.f32 0.0, %v580
  %v582 = vpop.f32.mrf.mxu0
  %583 = vdwg.mxu0
  %v584 = vadd.f32 %v183, %v581
  %v585 = vxor.u32 %v584, 2147483648
  %v586 = vmul.f32 %v585, 1.442695
  %v587 = vpow.pop %v586
  %v588 = vadd.f32 %v587, 1.0
  %v589 = vrcp.pop %v588
  %v590 = vmul.f32 1.0, %v589
  %v591 = vtanh.pop %v584
  %v592 = vmul.f32 %v590, %v502
  %594 = vrot.lane.b32.xlu0 %v591, 64
  %v595 = vpop.permute.xlu0 %594
  %v597 = vmul.f32 %v590, %v595
  %599 = vrot.lane.b32.xlu0 %v597, 32
  %v600 = vpop.permute.xlu0 %599
  %v602 = vadd.f32 %v592, %v600
  %v603 = vtanh.pop %v602
  %605 = vrot.lane.b32.xlu0 %v603, 64
  %v606 = vpop.permute.xlu0 %605
  %v608 = vmul.f32 %v590, %v606
  %610 = vrot.lane.b32.xlu0 %v608, 32
  %v611 = vpop.permute.xlu0 %610
  %v612 = vsel %vm210, %v611, 0
  %614 = vmatprep.subr.mxu0 0.0
  %615 = vmatpush1.msra.mxu0 0.0
  %616 = vmatprep.subr.mxu0 0.0
  %617 = vmatpush1.msra.mxu0 0.0
  %618 = vmatprep.subr.mxu0 0.0
  %619 = vmatpush1.msra.mxu0 0.0
  %620 = vmatprep.subr.mxu0 0.0
  %621 = vmatpush1.msra.mxu0 0.0
  %622 = vmatprep.subr.mxu0 0.0
  %623 = vmatpush1.msra.mxu0 0.0
  %624 = vmatprep.subr.mxu0 0.0
  %625 = vmatpush1.msra.mxu0 0.0
  %626 = vmatprep.subr.mxu0 0.0
  %627 = vmatpush1.msra.mxu0 0.0
  %628 = vmatprep.subr.mxu0 0.0
  %629 = vmatpush1.msra.mxu0 0.0
  %630 = vmatprep.subr.mxu0 0.0
  %631 = vmatpush1.msra.mxu0 0.0
  %632 = vmatprep.subr.mxu0 0.0
  %633 = vmatpush1.msra.mxu0 0.0
  %634 = vmatprep.subr.mxu0 0.0
  %635 = vmatpush1.msra.mxu0 0.0
  %636 = vmatprep.subr.mxu0 0.0
  %637 = vmatpush1.msra.mxu0 0.0
  %638 = vmatprep.subr.mxu0 0.0
  %639 = vmatpush1.msra.mxu0 %v209
  %640 = vmatprep.subr.mxu0 0.0
  %641 = vmatpush1.msra.mxu0 %v208
  %642 = vmatprep.subr.mxu0 0.0
  %643 = vmatpush1.msra.mxu0 %v207
  %644 = vmatprep.subr.mxu0 0.0
  %645 = vmatpush1.msra.mxu0 %v206
  %646 = vmatprep.subr.mxu0 0.0
  %647 = vmatpush2.msra.mxu0 0.0
  %648 = vmatprep.subr.mxu0 0.0
  %649 = vmatpush2.msra.mxu0 0.0
  %650 = vmatprep.subr.mxu0 0.0
  %651 = vmatpush2.msra.mxu0 0.0
  %652 = vmatprep.subr.mxu0 0.0
  %653 = vmatpush2.msra.mxu0 0.0
  %654 = vmatprep.subr.mxu0 0.0
  %655 = vmatpush2.msra.mxu0 0.0
  %656 = vmatprep.subr.mxu0 0.0
  %657 = vmatpush2.msra.mxu0 0.0
  %658 = vmatprep.subr.mxu0 0.0
  %659 = vmatpush2.msra.mxu0 0.0
  %660 = vmatprep.subr.mxu0 0.0
  %661 = vmatpush2.msra.mxu0 0.0
  %662 = vmatprep.subr.mxu0 0.0
  %663 = vmatpush2.msra.mxu0 0.0
  %664 = vmatprep.subr.mxu0 0.0
  %665 = vmatpush2.msra.mxu0 0.0
  %666 = vmatprep.subr.mxu0 0.0
  %667 = vmatpush2.msra.mxu0 0.0
  %668 = vmatprep.subr.mxu0 0.0
  %669 = vmatpush2.msra.mxu0 0.0
  %670 = vmatprep.subr.mxu0 0.0
  %671 = vmatpush2.msra.mxu0 0.0
  %672 = vmatprep.subr.mxu0 0.0
  %673 = vmatpush2.msra.mxu0 0.0
  %674 = vmatprep.subr.mxu0 0.0
  %675 = vmatpush2.msra.mxu0 0.0
  %676 = vmatprep.subr.mxu0 0.0
  %677 = vmatpush2.msra.mxu0 0.0
  %678 = vmatprep.mubr.f32.mxu0 0.0
  %679 = vmatmul.mubr.f32.gmra.mxu0 %v612
  %v680 = vpop.f32.mrf.mxu0
  %v681 = vadd.f32 0.0, %v680
  %v682 = vpop.f32.mrf.mxu0
  %683 = vdwg.mxu0
  %v684 = vadd.f32 %v188, %v681
  %v685 = vxor.u32 %v684, 2147483648
  %v686 = vmul.f32 %v685, 1.442695
  %v687 = vpow.pop %v686
  %v688 = vadd.f32 %v687, 1.0
  %v689 = vrcp.pop %v688
  %v690 = vmul.f32 1.0, %v689
  %v691 = vtanh.pop %v684
  %v692 = vmul.f32 %v690, %v602
  %694 = vrot.lane.b32.xlu0 %v691, 64
  %v695 = vpop.permute.xlu0 %694
  %v697 = vmul.f32 %v690, %v695
  %699 = vrot.lane.b32.xlu0 %v697, 32
  %v700 = vpop.permute.xlu0 %699
  %v702 = vadd.f32 %v692, %v700
  %v703 = vtanh.pop %v702
  %705 = vrot.lane.b32.xlu0 %v703, 64
  %v706 = vpop.permute.xlu0 %705
  %v708 = vmul.f32 %v690, %v706
  %710 = vrot.lane.b32.xlu0 %v708, 32
  %v711 = vpop.permute.xlu0 %710
  %v712 = vsel %vm210, %v711, 0
  %714 = vmatprep.subr.mxu0 0.0
  %715 = vmatpush1.msra.mxu0 0.0
  %716 = vmatprep.subr.mxu0 0.0
  %717 = vmatpush1.msra.mxu0 0.0
  %718 = vmatprep.subr.mxu0 0.0
  %719 = vmatpush1.msra.mxu0 0.0
  %720 = vmatprep.subr.mxu0 0.0
  %721 = vmatpush1.msra.mxu0 0.0
  %722 = vmatprep.subr.mxu0 0.0
  %723 = vmatpush1.msra.mxu0 0.0
  %724 = vmatprep.subr.mxu0 0.0
  %725 = vmatpush1.msra.mxu0 0.0
  %726 = vmatprep.subr.mxu0 0.0
  %727 = vmatpush1.msra.mxu0 0.0
  %728 = vmatprep.subr.mxu0 0.0
  %729 = vmatpush1.msra.mxu0 0.0
  %730 = vmatprep.subr.mxu0 0.0
  %731 = vmatpush1.msra.mxu0 0.0
  %732 = vmatprep.subr.mxu0 0.0
  %733 = vmatpush1.msra.mxu0 0.0
  %734 = vmatprep.subr.mxu0 0.0
  %735 = vmatpush1.msra.mxu0 0.0
  %736 = vmatprep.subr.mxu0 0.0
  %737 = vmatpush1.msra.mxu0 0.0
  %738 = vmatprep.subr.mxu0 0.0
  %739 = vmatpush1.msra.mxu0 %v209
  %740 = vmatprep.subr.mxu0 0.0
  %741 = vmatpush1.msra.mxu0 %v208
  %742 = vmatprep.subr.mxu0 0.0
  %743 = vmatpush1.msra.mxu0 %v207
  %744 = vmatprep.subr.mxu0 0.0
  %745 = vmatpush1.msra.mxu0 %v206
  %746 = vmatprep.subr.mxu0 0.0
  %747 = vmatpush2.msra.mxu0 0.0
  %748 = vmatprep.subr.mxu0 0.0
  %749 = vmatpush2.msra.mxu0 0.0
  %750 = vmatprep.subr.mxu0 0.0
  %751 = vmatpush2.msra.mxu0 0.0
  %752 = vmatprep.subr.mxu0 0.0
  %753 = vmatpush2.msra.mxu0 0.0
  %754 = vmatprep.subr.mxu0 0.0
  %755 = vmatpush2.msra.mxu0 0.0
  %756 = vmatprep.subr.mxu0 0.0
  %757 = vmatpush2.msra.mxu0 0.0
  %758 = vmatprep.subr.mxu0 0.0
  %759 = vmatpush2.msra.mxu0 0.0
  %760 = vmatprep.subr.mxu0 0.0
  %761 = vmatpush2.msra.mxu0 0.0
  %762 = vmatprep.subr.mxu0 0.0
  %763 = vmatpush2.msra.mxu0 0.0
  %764 = vmatprep.subr.mxu0 0.0
  %765 = vmatpush2.msra.mxu0 0.0
  %766 = vmatprep.subr.mxu0 0.0
  %767 = vmatpush2.msra.mxu0 0.0
  %768 = vmatprep.subr.mxu0 0.0
  %769 = vmatpush2.msra.mxu0 0.0
  %770 = vmatprep.subr.mxu0 0.0
  %771 = vmatpush2.msra.mxu0 0.0
  %772 = vmatprep.subr.mxu0 0.0
  %773 = vmatpush2.msra.mxu0 0.0
  %774 = vmatprep.subr.mxu0 0.0
  %775 = vmatpush2.msra.mxu0 0.0
  %776 = vmatprep.subr.mxu0 0.0
  %777 = vmatpush2.msra.mxu0 0.0
  %778 = vmatprep.mubr.f32.mxu0 0.0
  %779 = vmatmul.mubr.f32.gmra.mxu0 %v712
  %v780 = vpop.f32.mrf.mxu0
  %v781 = vadd.f32 0.0, %v780
  %v782 = vpop.f32.mrf.mxu0
  %783 = vdwg.mxu0
  %v784 = vadd.f32 %v193, %v781
  %v785 = vxor.u32 %v784, 2147483648
  %v786 = vmul.f32 %v785, 1.442695
  %v787 = vpow.pop %v786
  %v788 = vadd.f32 %v787, 1.0
  %v789 = vrcp.pop %v788
  %v790 = vmul.f32 1.0, %v789
  %v791 = vtanh.pop %v784
  %v792 = vmul.f32 %v790, %v702
  %794 = vrot.lane.b32.xlu0 %v791, 64
  %v795 = vpop.permute.xlu0 %794
  %v797 = vmul.f32 %v790, %v795
  %799 = vrot.lane.b32.xlu0 %v797, 32
  %v800 = vpop.permute.xlu0 %799
  %v802 = vadd.f32 %v792, %v800
  %v803 = vtanh.pop %v802
  %805 = vrot.lane.b32.xlu0 %v803, 64
  %v806 = vpop.permute.xlu0 %805
  %v808 = vmul.f32 %v790, %v806
  %810 = vrot.lane.b32.xlu0 %v808, 32
  %v811 = vpop.permute.xlu0 %810
  %v812 = vsel %vm210, %v811, 0
  %814 = vmatprep.subr.mxu0 0.0
  %815 = vmatpush1.msra.mxu0 0.0
  %816 = vmatprep.subr.mxu0 0.0
  %817 = vmatpush1.msra.mxu0 0.0
  %818 = vmatprep.subr.mxu0 0.0
  %819 = vmatpush1.msra.mxu0 0.0
  %820 = vmatprep.subr.mxu0 0.0
  %821 = vmatpush1.msra.mxu0 0.0
  %822 = vmatprep.subr.mxu0 0.0
  %823 = vmatpush1.msra.mxu0 0.0
  %824 = vmatprep.subr.mxu0 0.0
  %825 = vmatpush1.msra.mxu0 0.0
  %826 = vmatprep.subr.mxu0 0.0
  %827 = vmatpush1.msra.mxu0 0.0
  %828 = vmatprep.subr.mxu0 0.0
  %829 = vmatpush1.msra.mxu0 0.0
  %830 = vmatprep.subr.mxu0 0.0
  %831 = vmatpush1.msra.mxu0 0.0
  %832 = vmatprep.subr.mxu0 0.0
  %833 = vmatpush1.msra.mxu0 0.0
  %834 = vmatprep.subr.mxu0 0.0
  %835 = vmatpush1.msra.mxu0 0.0
  %836 = vmatprep.subr.mxu0 0.0
  %837 = vmatpush1.msra.mxu0 0.0
  %838 = vmatprep.subr.mxu0 0.0
  %839 = vmatpush1.msra.mxu0 %v209
  %840 = vmatprep.subr.mxu0 0.0
  %841 = vmatpush1.msra.mxu0 %v208
  %842 = vmatprep.subr.mxu0 0.0
  %843 = vmatpush1.msra.mxu0 %v207
  %844 = vmatprep.subr.mxu0 0.0
  %845 = vmatpush1.msra.mxu0 %v206
  %846 = vmatprep.subr.mxu0 0.0
  %847 = vmatpush2.msra.mxu0 0.0
  %848 = vmatprep.subr.mxu0 0.0
  %849 = vmatpush2.msra.mxu0 0.0
  %850 = vmatprep.subr.mxu0 0.0
  %851 = vmatpush2.msra.mxu0 0.0
  %852 = vmatprep.subr.mxu0 0.0
  %853 = vmatpush2.msra.mxu0 0.0
  %854 = vmatprep.subr.mxu0 0.0
  %855 = vmatpush2.msra.mxu0 0.0
  %856 = vmatprep.subr.mxu0 0.0
  %857 = vmatpush2.msra.mxu0 0.0
  %858 = vmatprep.subr.mxu0 0.0
  %859 = vmatpush2.msra.mxu0 0.0
  %860 = vmatprep.subr.mxu0 0.0
  %861 = vmatpush2.msra.mxu0 0.0
  %862 = vmatprep.subr.mxu0 0.0
  %863 = vmatpush2.msra.mxu0 0.0
  %864 = vmatprep.subr.mxu0 0.0
  %865 = vmatpush2.msra.mxu0 0.0
  %866 = vmatprep.subr.mxu0 0.0
  %867 = vmatpush2.msra.mxu0 0.0
  %868 = vmatprep.subr.mxu0 0.0
  %869 = vmatpush2.msra.mxu0 0.0
  %870 = vmatprep.subr.mxu0 0.0
  %871 = vmatpush2.msra.mxu0 0.0
  %872 = vmatprep.subr.mxu0 0.0
  %873 = vmatpush2.msra.mxu0 0.0
  %874 = vmatprep.subr.mxu0 0.0
  %875 = vmatpush2.msra.mxu0 0.0
  %876 = vmatprep.subr.mxu0 0.0
  %877 = vmatpush2.msra.mxu0 0.0
  %878 = vmatprep.mubr.f32.mxu0 0.0
  %879 = vmatmul.mubr.f32.gmra.mxu0 %v812
  %v880 = vpop.f32.mrf.mxu0
  %v881 = vadd.f32 0.0, %v880
  %v882 = vpop.f32.mrf.mxu0
  %883 = vdwg.mxu0
  %v884 = vadd.f32 %v198, %v881
  %v885 = vxor.u32 %v884, 2147483648
  %v886 = vmul.f32 %v885, 1.442695
  %v887 = vpow.pop %v886
  %v888 = vadd.f32 %v887, 1.0
  %v889 = vrcp.pop %v888
  %v890 = vmul.f32 1.0, %v889
  %v891 = vtanh.pop %v884
  %v892 = vmul.f32 %v890, %v802
  %894 = vrot.lane.b32.xlu0 %v891, 64
  %v895 = vpop.permute.xlu0 %894
  %v897 = vmul.f32 %v890, %v895
  %899 = vrot.lane.b32.xlu0 %v897, 32
  %v900 = vpop.permute.xlu0 %899
  %v902 = vadd.f32 %v892, %v900
  %v903 = vtanh.pop %v902
  %905 = vrot.lane.b32.xlu0 %v903, 64
  %v906 = vpop.permute.xlu0 %905
  %v908 = vmul.f32 %v890, %v906
  %910 = vrot.lane.b32.xlu0 %v908, 32
  %v911 = vpop.permute.xlu0 %910
  %v912 = vsel %vm210, %v911, 0
  %914 = vmatprep.subr.mxu0 0.0
  %915 = vmatpush1.msra.mxu0 0.0
  %916 = vmatprep.subr.mxu0 0.0
  %917 = vmatpush1.msra.mxu0 0.0
  %918 = vmatprep.subr.mxu0 0.0
  %919 = vmatpush1.msra.mxu0 0.0
  %920 = vmatprep.subr.mxu0 0.0
  %921 = vmatpush1.msra.mxu0 0.0
  %922 = vmatprep.subr.mxu0 0.0
  %923 = vmatpush1.msra.mxu0 0.0
  %924 = vmatprep.subr.mxu0 0.0
  %925 = vmatpush1.msra.mxu0 0.0
  %926 = vmatprep.subr.mxu0 0.0
  %927 = vmatpush1.msra.mxu0 0.0
  %928 = vmatprep.subr.mxu0 0.0
  %929 = vmatpush1.msra.mxu0 0.0
  %930 = vmatprep.subr.mxu0 0.0
  %931 = vmatpush1.msra.mxu0 0.0
  %932 = vmatprep.subr.mxu0 0.0
  %933 = vmatpush1.msra.mxu0 0.0
  %934 = vmatprep.subr.mxu0 0.0
  %935 = vmatpush1.msra.mxu0 0.0
  %936 = vmatprep.subr.mxu0 0.0
  %937 = vmatpush1.msra.mxu0 0.0
  %938 = vmatprep.subr.mxu0 0.0
  %939 = vmatpush1.msra.mxu0 %v209
  %940 = vmatprep.subr.mxu0 0.0
  %941 = vmatpush1.msra.mxu0 %v208
  %942 = vmatprep.subr.mxu0 0.0
  %943 = vmatpush1.msra.mxu0 %v207
  %944 = vmatprep.subr.mxu0 0.0
  %945 = vmatpush1.msra.mxu0 %v206
  %946 = vmatprep.subr.mxu0 0.0
  %947 = vmatpush2.msra.mxu0 0.0
  %948 = vmatprep.subr.mxu0 0.0
  %949 = vmatpush2.msra.mxu0 0.0
  %950 = vmatprep.subr.mxu0 0.0
  %951 = vmatpush2.msra.mxu0 0.0
  %952 = vmatprep.subr.mxu0 0.0
  %953 = vmatpush2.msra.mxu0 0.0
  %954 = vmatprep.subr.mxu0 0.0
  %955 = vmatpush2.msra.mxu0 0.0
  %956 = vmatprep.subr.mxu0 0.0
  %957 = vmatpush2.msra.mxu0 0.0
  %958 = vmatprep.subr.mxu0 0.0
  %959 = vmatpush2.msra.mxu0 0.0
  %960 = vmatprep.subr.mxu0 0.0
  %961 = vmatpush2.msra.mxu0 0.0
  %962 = vmatprep.subr.mxu0 0.0
  %963 = vmatpush2.msra.mxu0 0.0
  %964 = vmatprep.subr.mxu0 0.0
  %965 = vmatpush2.msra.mxu0 0.0
  %966 = vmatprep.subr.mxu0 0.0
  %967 = vmatpush2.msra.mxu0 0.0
  %968 = vmatprep.subr.mxu0 0.0
  %969 = vmatpush2.msra.mxu0 0.0
  %970 = vmatprep.subr.mxu0 0.0
  %971 = vmatpush2.msra.mxu0 0.0
  %972 = vmatprep.subr.mxu0 0.0
  %973 = vmatpush2.msra.mxu0 0.0
  %974 = vmatprep.subr.mxu0 0.0
  %975 = vmatpush2.msra.mxu0 0.0
  %976 = vmatprep.subr.mxu0 0.0
  %977 = vmatpush2.msra.mxu0 0.0
  %978 = vmatprep.mubr.f32.mxu0 0.0
  %979 = vmatmul.mubr.f32.gmra.mxu0 %v912
  %v980 = vpop.f32.mrf.mxu0
  %v981 = vadd.f32 0.0, %v980
  %v982 = vpop.f32.mrf.mxu0
  %983 = vdwg.mxu0
  %v984 = vadd.f32 %v203, %v981
  %v985 = vxor.u32 %v984, 2147483648
  %v986 = vmul.f32 %v985, 1.442695
  %v987 = vpow.pop %v986
  %v988 = vadd.f32 %v987, 1.0
  %v989 = vrcp.pop %v988
  %v990 = vmul.f32 1.0, %v989
  %v991 = vtanh.pop %v984
  %v992 = vmul.f32 %v990, %v902
  %994 = vrot.lane.b32.xlu0 %v991, 64
  %v995 = vpop.permute.xlu0 %994
  %v997 = vmul.f32 %v990, %v995
  %999 = vrot.lane.b32.xlu0 %v997, 32
  %v1000 = vpop.permute.xlu0 %999
  %v1002 = vadd.f32 %v992, %v1000
  %v1003 = vtanh.pop %v1002
  %1005 = vrot.lane.b32.xlu0 %v1003, 64
  %v1006 = vpop.permute.xlu0 %1005
  %v1008 = vmul.f32 %v990, %v1006
  %v1009 = vmul.f32 %v308, %v1008
  %v1010 = vmul.f32 %v408, %v1008
  %v1011 = vmul.f32 %v508, %v1008
  %v1012 = vmul.f32 %v608, %v1008
  %v1013 = vmul.f32 %v708, %v1008
  %v1014 = vmul.f32 %v808, %v1008
  %v1015 = vmul.f32 %v908, %v1008
  %v1016 = vmul.f32 %v1008, %v1008
  %1025 = vrot.lane.b32.xlu0 %v1009, 32
  %v1026 = vpop.permute.xlu0 %1025
  %1027 = vrot.lane.b32.xlu0 %v1010, 32
  %v1028 = vpop.permute.xlu0 %1027
  %1029 = vrot.lane.b32.xlu0 %v1011, 32
  %v1030 = vpop.permute.xlu0 %1029
  %1031 = vrot.lane.b32.xlu0 %v1012, 32
  %v1032 = vpop.permute.xlu0 %1031
  %1033 = vrot.lane.b32.xlu0 %v1013, 32
  %v1034 = vpop.permute.xlu0 %1033
  %1035 = vrot.lane.b32.xlu0 %v1014, 32
  %v1036 = vpop.permute.xlu0 %1035
  %1037 = vrot.lane.b32.xlu0 %v1015, 32
  %v1038 = vpop.permute.xlu0 %1037
  %1039 = vrot.lane.b32.xlu0 %v1016, 32
  %v1040 = vpop.permute.xlu0 %1039
  %v1049 = vsel %vm210, %v1026, 0.0
  %1050 = vadd.xlane.f32.xlu0 %v1049
  %v1051 = vpop.xlane.xlu0 %1050
  %v1052 = vsel %vm210, %v1028, 0.0
  %1053 = vadd.xlane.f32.xlu0 %v1052
  %v1054 = vpop.xlane.xlu0 %1053
  %v1055 = vsel %vm210, %v1030, 0.0
  %1056 = vadd.xlane.f32.xlu0 %v1055
  %v1057 = vpop.xlane.xlu0 %1056
  %v1058 = vsel %vm210, %v1032, 0.0
  %1059 = vadd.xlane.f32.xlu0 %v1058
  %v1060 = vpop.xlane.xlu0 %1059
  %v1061 = vsel %vm210, %v1034, 0.0
  %1062 = vadd.xlane.f32.xlu0 %v1061
  %v1063 = vpop.xlane.xlu0 %1062
  %v1064 = vsel %vm210, %v1036, 0.0
  %1065 = vadd.xlane.f32.xlu0 %v1064
  %v1066 = vpop.xlane.xlu0 %1065
  %v1067 = vsel %vm210, %v1038, 0.0
  %1068 = vadd.xlane.f32.xlu0 %v1067
  %v1069 = vpop.xlane.xlu0 %1068
  %v1070 = vsel %vm210, %v1040, 0.0
  %1071 = vadd.xlane.f32.xlu0 %v1070
  %v1072 = vpop.xlane.xlu0 %1071
  %v1073 = vmax.f32 %v1051, %v1063
  %v1074 = vmax.f32 %v1054, %v1066
  %v1075 = vmax.f32 %v1057, %v1069
  %v1076 = vmax.f32 %v1060, %v1072
  %v1077 = vmax.f32 %v1073, %v1074
  %v1078 = vmax.f32 %v1075, %v1076
  %v1079 = vmax.f32 %v1077, %v1078
  %v1080 = vsub.f32 %v1051, %v1079
  %v1081 = vsub.f32 %v1054, %v1079
  %v1082 = vsub.f32 %v1057, %v1079
  %v1083 = vsub.f32 %v1060, %v1079
  %v1084 = vsub.f32 %v1063, %v1079
  %v1085 = vsub.f32 %v1066, %v1079
  %v1086 = vsub.f32 %v1069, %v1079
  %v1087 = vsub.f32 %v1072, %v1079
  %v1088 = vmul.f32 %v1080, 1.442695
  %v1089 = vpow.pop %v1088
  %v1090 = vmul.f32 %v1081, 1.442695
  %v1091 = vpow.pop %v1090
  %v1092 = vmul.f32 %v1082, 1.442695
  %v1093 = vpow.pop %v1092
  %v1094 = vmul.f32 %v1083, 1.442695
  %v1095 = vpow.pop %v1094
  %v1096 = vmul.f32 %v1084, 1.442695
  %v1097 = vpow.pop %v1096
  %v1098 = vmul.f32 %v1085, 1.442695
  %v1099 = vpow.pop %v1098
  %v1100 = vmul.f32 %v1086, 1.442695
  %v1101 = vpow.pop %v1100
  %v1102 = vmul.f32 %v1087, 1.442695
  %v1103 = vpow.pop %v1102
  %v1104 = vadd.f32 %v1089, %v1091
  %v1105 = vadd.f32 %v1104, %v1093
  %v1106 = vadd.f32 %v1105, %v1095
  %v1107 = vadd.f32 %v1106, %v1097
  %v1108 = vadd.f32 %v1107, %v1099
  %v1109 = vadd.f32 %v1108, %v1101
  %v1110 = vadd.f32 %v1109, %v1103
  %v1111 = vrcp.pop %v1110
  %v1112 = vmul.f32 %v1089, %v1111
  %v1113 = vmul.f32 %v1091, %v1111
  %v1114 = vmul.f32 %v1093, %v1111
  %v1115 = vmul.f32 %v1095, %v1111
  %v1116 = vmul.f32 %v1097, %v1111
  %v1117 = vmul.f32 %v1099, %v1111
  %v1118 = vmul.f32 %v1101, %v1111
  %v1119 = vmul.f32 %v1103, %v1111
  %v1120 = vmul.f32 %v1112, %v308
  %v1121 = vmul.f32 %v1113, %v408
  %v1122 = vmul.f32 %v1114, %v508
  %v1123 = vmul.f32 %v1115, %v608
  %v1124 = vmul.f32 %v1116, %v708
  %v1125 = vmul.f32 %v1117, %v808
  %v1126 = vmul.f32 %v1118, %v908
  %v1127 = vmul.f32 %v1119, %v1008
  %vm1128 = vcmask 1048320
  %v1129 = vsel %vm1128, %v1120, 0.0
  %v1130 = vsel %vm1128, %v1121, 0.0
  %v1131 = vadd.f32 %v1129, %v1130
  %v1132 = vsel %vm1128, %v1122, 0.0
  %v1133 = vadd.f32 %v1131, %v1132
  %v1134 = vsel %vm1128, %v1123, 0.0
  %v1135 = vadd.f32 %v1133, %v1134
  %v1136 = vsel %vm1128, %v1124, 0.0
  %v1137 = vadd.f32 %v1135, %v1136
  %v1138 = vsel %vm1128, %v1125, 0.0
  %v1139 = vadd.f32 %v1137, %v1138
  %v1140 = vsel %vm1128, %v1126, 0.0
  %v1141 = vadd.f32 %v1139, %v1140
  %v1142 = vsel %vm1128, %v1127, 0.0
  %v1143 = vadd.f32 %v1141, %v1142
  %v1144 = vld [vmem:[%s1 + $0x60] sm:$0xff]
  %v1145 = vld [vmem:[%s1 + $0x68] sm:$0xff]
  %v1146 = vld [vmem:[%s1 + $0x70] sm:$0xff]
  %v1147 = vld [vmem:[%s1 + $0x78] sm:$0xff]
  %v1148 = vld [vmem:[%s1 + $0x90] sm:$0x1]
  %v1149 = vlaneseq
  %v1150 = vshrl.u32 %v1149, 7
  %v1151 = vsub.s32 0, %v1150
  %v1152 = vrot.slane %v1148, %v1151
  %1154 = vrot.lane.b32.xlu0 %v1143, 32
  %v1155 = vpop.permute.xlu0 %1154
  %v1156 = vsel %vm210, %v1155, 0
  %1158 = vmatprep.subr.mxu0 0.0
  %1159 = vmatpush1.msra.mxu0 0.0
  %1160 = vmatprep.subr.mxu0 0.0
  %1161 = vmatpush1.msra.mxu0 0.0
  %1162 = vmatprep.subr.mxu0 0.0
  %1163 = vmatpush1.msra.mxu0 0.0
  %1164 = vmatprep.subr.mxu0 0.0
  %1165 = vmatpush1.msra.mxu0 0.0
  %1166 = vmatprep.subr.mxu0 0.0
  %1167 = vmatpush1.msra.mxu0 0.0
  %1168 = vmatprep.subr.mxu0 0.0
  %1169 = vmatpush1.msra.mxu0 0.0
  %1170 = vmatprep.subr.mxu0 0.0
  %1171 = vmatpush1.msra.mxu0 0.0
  %1172 = vmatprep.subr.mxu0 0.0
  %1173 = vmatpush1.msra.mxu0 0.0
  %1174 = vmatprep.subr.mxu0 0.0
  %1175 = vmatpush1.msra.mxu0 0.0
  %1176 = vmatprep.subr.mxu0 0.0
  %1177 = vmatpush1.msra.mxu0 0.0
  %1178 = vmatprep.subr.mxu0 0.0
  %1179 = vmatpush1.msra.mxu0 0.0
  %1180 = vmatprep.subr.mxu0 0.0
  %1181 = vmatpush1.msra.mxu0 0.0
  %1182 = vmatprep.subr.mxu0 0.0
  %1183 = vmatpush1.msra.mxu0 %v1147
  %1184 = vmatprep.subr.mxu0 0.0
  %1185 = vmatpush1.msra.mxu0 %v1146
  %1186 = vmatprep.subr.mxu0 0.0
  %1187 = vmatpush1.msra.mxu0 %v1145
  %1188 = vmatprep.subr.mxu0 0.0
  %1189 = vmatpush1.msra.mxu0 %v1144
  %1190 = vmatprep.subr.mxu0 0.0
  %1191 = vmatpush2.msra.mxu0 0.0
  %1192 = vmatprep.subr.mxu0 0.0
  %1193 = vmatpush2.msra.mxu0 0.0
  %1194 = vmatprep.subr.mxu0 0.0
  %1195 = vmatpush2.msra.mxu0 0.0
  %1196 = vmatprep.subr.mxu0 0.0
  %1197 = vmatpush2.msra.mxu0 0.0
  %1198 = vmatprep.subr.mxu0 0.0
  %1199 = vmatpush2.msra.mxu0 0.0
  %1200 = vmatprep.subr.mxu0 0.0
  %1201 = vmatpush2.msra.mxu0 0.0
  %1202 = vmatprep.subr.mxu0 0.0
  %1203 = vmatpush2.msra.mxu0 0.0
  %1204 = vmatprep.subr.mxu0 0.0
  %1205 = vmatpush2.msra.mxu0 0.0
  %1206 = vmatprep.subr.mxu0 0.0
  %1207 = vmatpush2.msra.mxu0 0.0
  %1208 = vmatprep.subr.mxu0 0.0
  %1209 = vmatpush2.msra.mxu0 0.0
  %1210 = vmatprep.subr.mxu0 0.0
  %1211 = vmatpush2.msra.mxu0 0.0
  %1212 = vmatprep.subr.mxu0 0.0
  %1213 = vmatpush2.msra.mxu0 0.0
  %1214 = vmatprep.subr.mxu0 0.0
  %1215 = vmatpush2.msra.mxu0 0.0
  %1216 = vmatprep.subr.mxu0 0.0
  %1217 = vmatpush2.msra.mxu0 0.0
  %1218 = vmatprep.subr.mxu0 0.0
  %1219 = vmatpush2.msra.mxu0 0.0
  %1220 = vmatprep.subr.mxu0 0.0
  %1221 = vmatpush2.msra.mxu0 0.0
  %1222 = vmatprep.mubr.f32.mxu0 0.0
  %1223 = vmatmul.mubr.f32.gmra.mxu0 %v1156
  %v1224 = vpop.f32.mrf.mxu0
  %v1225 = vadd.f32 %v1152, %v1224
  %v1226 = vpop.f32.mrf.mxu0
  %1227 = vdwg.mxu0
  %v1228 = vld [vmem:[%s0 + $0x40] sm:$0xff]
  %v1229 = vld [vmem:[%s0 + $0x48] sm:$0xff]
  %v1230 = vld [vmem:[%s0 + $0x50] sm:$0xff]
  %v1231 = vld [vmem:[%s0 + $0x58] sm:$0xff]
  %v1232 = vld [vmem:[%s0 + $0x60] sm:$0xff]
  %v1233 = vld [vmem:[%s0 + $0x68] sm:$0xff]
  %v1234 = vld [vmem:[%s0 + $0x70] sm:$0xff]
  %v1235 = vld [vmem:[%s0 + $0x78] sm:$0xff]
  %v1236 = vld [vmem:[%s0 + $0x80] sm:$0xff]
  %v1237 = vld [vmem:[%s0 + $0x88] sm:$0xff]
  %v1238 = vld [vmem:[%s0 + $0x90] sm:$0xff]
  %v1239 = vld [vmem:[%s0 + $0x98] sm:$0xff]
  %1240 = vset.pattern.permute.xlu0 0
  %1241 = vperm.xlu0 %1240, %v1228
  %v1242 = vpop.permute.xlu0 %1241
  %1243 = vset.pattern.permute.xlu0 0
  %1244 = vperm.xlu0 %1243, %v1229
  %v1245 = vpop.permute.xlu0 %1244
  %1246 = vset.pattern.permute.xlu0 0
  %1247 = vperm.xlu0 %1246, %v1230
  %v1248 = vpop.permute.xlu0 %1247
  %1249 = vset.pattern.permute.xlu0 0
  %1250 = vperm.xlu0 %1249, %v1231
  %v1251 = vpop.permute.xlu0 %1250
  %1252 = vset.pattern.permute.xlu0 0
  %1253 = vperm.xlu0 %1252, %v1232
  %v1254 = vpop.permute.xlu0 %1253
  %1255 = vset.pattern.permute.xlu0 0
  %1256 = vperm.xlu0 %1255, %v1233
  %v1257 = vpop.permute.xlu0 %1256
  %1258 = vset.pattern.permute.xlu0 0
  %1259 = vperm.xlu0 %1258, %v1234
  %v1260 = vpop.permute.xlu0 %1259
  %1261 = vset.pattern.permute.xlu0 0
  %1262 = vperm.xlu0 %1261, %v1235
  %v1263 = vpop.permute.xlu0 %1262
  %1264 = vset.pattern.permute.xlu0 0
  %1265 = vperm.xlu0 %1264, %v1236
  %v1266 = vpop.permute.xlu0 %1265
  %1267 = vset.pattern.permute.xlu0 0
  %1268 = vperm.xlu0 %1267, %v1237
  %v1269 = vpop.permute.xlu0 %1268
  %1270 = vset.pattern.permute.xlu0 0
  %1271 = vperm.xlu0 %1270, %v1238
  %v1272 = vpop.permute.xlu0 %1271
  %1273 = vset.pattern.permute.xlu0 0
  %1274 = vperm.xlu0 %1273, %v1239
  %v1275 = vpop.permute.xlu0 %1274
  %vm1276 = vcmp.eq.s32.totalorder %v1242, %v23
  %vm1277 = vcmp.eq.s32.totalorder %v1245, %v23
  %vm1278 = vcmp.eq.s32.totalorder %v1248, %v23
  %vm1279 = vcmp.eq.s32.totalorder %v1251, %v23
  %vm1280 = vcmp.eq.s32.totalorder %v1254, %v23
  %vm1281 = vcmp.eq.s32.totalorder %v1257, %v23
  %vm1282 = vcmp.eq.s32.totalorder %v1260, %v23
  %vm1283 = vcmp.eq.s32.totalorder %v1263, %v23
  %vm1284 = vcmp.eq.s32.totalorder %v1266, %v23
  %vm1285 = vcmp.eq.s32.totalorder %v1269, %v23
  %vm1286 = vcmp.eq.s32.totalorder %v1272, %v23
  %vm1287 = vcmp.eq.s32.totalorder %v1275, %v23
  %v1288 = vsel %vm1276, 1.0, 0.0
  %v1289 = vsel %vm1277, 1.0, 0.0
  %v1290 = vsel %vm1278, 1.0, 0.0
  %v1291 = vsel %vm1279, 1.0, 0.0
  %v1292 = vsel %vm1280, 1.0, 0.0
  %v1293 = vsel %vm1281, 1.0, 0.0
  %v1294 = vsel %vm1282, 1.0, 0.0
  %v1295 = vsel %vm1283, 1.0, 0.0
  %v1296 = vsel %vm1284, 1.0, 0.0
  %v1297 = vsel %vm1285, 1.0, 0.0
  %v1298 = vsel %vm1286, 1.0, 0.0
  %v1299 = vsel %vm1287, 1.0, 0.0
  %v1300 = vld [vmem:[%s2] sm:$0xff]
  %v1301 = vld [vmem:[%s2 + $0x8] sm:$0xff]
  %v1302 = vld [vmem:[%s2 + $0x10] sm:$0xff]
  %v1303 = vld [vmem:[%s2 + $0x18] sm:$0xff]
  %v1305 = vsel %vm210, %v1288, 0
  %v1308 = vsel %vm210, %v1289, 0
  %v1311 = vsel %vm210, %v1290, 0
  %v1314 = vsel %vm210, %v1291, 0
  %v1317 = vsel %vm210, %v1292, 0
  %v1320 = vsel %vm210, %v1293, 0
  %v1323 = vsel %vm210, %v1294, 0
  %v1326 = vsel %vm210, %v1295, 0
  %v1329 = vsel %vm210, %v1296, 0
  %v1332 = vsel %vm210, %v1297, 0
  %v1335 = vsel %vm210, %v1298, 0
  %v1338 = vsel %vm210, %v1299, 0
  %1340 = vmatprep.subr.mxu0 0.0
  %1341 = vmatpush1.msra.mxu0 0.0
  %1342 = vmatprep.subr.mxu0 0.0
  %1343 = vmatpush1.msra.mxu0 0.0
  %1344 = vmatprep.subr.mxu0 0.0
  %1345 = vmatpush1.msra.mxu0 0.0
  %1346 = vmatprep.subr.mxu0 0.0
  %1347 = vmatpush1.msra.mxu0 0.0
  %1348 = vmatprep.subr.mxu0 0.0
  %1349 = vmatpush1.msra.mxu0 0.0
  %1350 = vmatprep.subr.mxu0 0.0
  %1351 = vmatpush1.msra.mxu0 0.0
  %1352 = vmatprep.subr.mxu0 0.0
  %1353 = vmatpush1.msra.mxu0 0.0
  %1354 = vmatprep.subr.mxu0 0.0
  %1355 = vmatpush1.msra.mxu0 0.0
  %1356 = vmatprep.subr.mxu0 0.0
  %1357 = vmatpush1.msra.mxu0 0.0
  %1358 = vmatprep.subr.mxu0 0.0
  %1359 = vmatpush1.msra.mxu0 0.0
  %1360 = vmatprep.subr.mxu0 0.0
  %1361 = vmatpush1.msra.mxu0 0.0
  %1362 = vmatprep.subr.mxu0 0.0
  %1363 = vmatpush1.msra.mxu0 0.0
  %1364 = vmatprep.subr.mxu0 0.0
  %1365 = vmatpush1.msra.mxu0 %v1303
  %1366 = vmatprep.subr.mxu0 0.0
  %1367 = vmatpush1.msra.mxu0 %v1302
  %1368 = vmatprep.subr.mxu0 0.0
  %1369 = vmatpush1.msra.mxu0 %v1301
  %1370 = vmatprep.subr.mxu0 0.0
  %1371 = vmatpush1.msra.mxu0 %v1300
  %1372 = vmatprep.subr.mxu0 0.0
  %1373 = vmatpush2.msra.mxu0 0.0
  %1374 = vmatprep.subr.mxu0 0.0
  %1375 = vmatpush2.msra.mxu0 0.0
  %1376 = vmatprep.subr.mxu0 0.0
  %1377 = vmatpush2.msra.mxu0 0.0
  %1378 = vmatprep.subr.mxu0 0.0
  %1379 = vmatpush2.msra.mxu0 0.0
  %1380 = vmatprep.subr.mxu0 0.0
  %1381 = vmatpush2.msra.mxu0 0.0
  %1382 = vmatprep.subr.mxu0 0.0
  %1383 = vmatpush2.msra.mxu0 0.0
  %1384 = vmatprep.subr.mxu0 0.0
  %1385 = vmatpush2.msra.mxu0 0.0
  %1386 = vmatprep.subr.mxu0 0.0
  %1387 = vmatpush2.msra.mxu0 0.0
  %1388 = vmatprep.subr.mxu0 0.0
  %1389 = vmatpush2.msra.mxu0 0.0
  %1390 = vmatprep.subr.mxu0 0.0
  %1391 = vmatpush2.msra.mxu0 0.0
  %1392 = vmatprep.subr.mxu0 0.0
  %1393 = vmatpush2.msra.mxu0 0.0
  %1394 = vmatprep.subr.mxu0 0.0
  %1395 = vmatpush2.msra.mxu0 0.0
  %1396 = vmatprep.subr.mxu0 0.0
  %1397 = vmatpush2.msra.mxu0 0.0
  %1398 = vmatprep.subr.mxu0 0.0
  %1399 = vmatpush2.msra.mxu0 0.0
  %1400 = vmatprep.subr.mxu0 0.0
  %1401 = vmatpush2.msra.mxu0 0.0
  %1402 = vmatprep.subr.mxu0 0.0
  %1403 = vmatpush2.msra.mxu0 0.0
  %1404 = vmatprep.mubr.f32.mxu0 0.0
  %1405 = vmatmul.mubr.f32.gmra.mxu0 %v1305
  %v1406 = vpop.f32.mrf.mxu0
  %v1407 = vadd.f32 0.0, %v1406
  %v1408 = vpop.f32.mrf.mxu0
  %1409 = vmatprep.mubr.f32.mxu0 0.0
  %1410 = vmatmul.mubr.f32.gmra.mxu0 %v1308
  %v1411 = vpop.f32.mrf.mxu0
  %v1412 = vadd.f32 0.0, %v1411
  %v1413 = vpop.f32.mrf.mxu0
  %1414 = vmatprep.mubr.f32.mxu0 0.0
  %1415 = vmatmul.mubr.f32.gmra.mxu0 %v1311
  %v1416 = vpop.f32.mrf.mxu0
  %v1417 = vadd.f32 0.0, %v1416
  %v1418 = vpop.f32.mrf.mxu0
  %1419 = vmatprep.mubr.f32.mxu0 0.0
  %1420 = vmatmul.mubr.f32.gmra.mxu0 %v1314
  %v1421 = vpop.f32.mrf.mxu0
  %v1422 = vadd.f32 0.0, %v1421
  %v1423 = vpop.f32.mrf.mxu0
  %1424 = vmatprep.mubr.f32.mxu0 0.0
  %1425 = vmatmul.mubr.f32.gmra.mxu0 %v1317
  %v1426 = vpop.f32.mrf.mxu0
  %v1427 = vadd.f32 0.0, %v1426
  %v1428 = vpop.f32.mrf.mxu0
  %1429 = vmatprep.mubr.f32.mxu0 0.0
  %1430 = vmatmul.mubr.f32.gmra.mxu0 %v1320
  %v1431 = vpop.f32.mrf.mxu0
  %v1432 = vadd.f32 0.0, %v1431
  %v1433 = vpop.f32.mrf.mxu0
  %1434 = vmatprep.mubr.f32.mxu0 0.0
  %1435 = vmatmul.mubr.f32.gmra.mxu0 %v1323
  %v1436 = vpop.f32.mrf.mxu0
  %v1437 = vadd.f32 0.0, %v1436
  %v1438 = vpop.f32.mrf.mxu0
  %1439 = vmatprep.mubr.f32.mxu0 0.0
  %1440 = vmatmul.mubr.f32.gmra.mxu0 %v1326
  %v1441 = vpop.f32.mrf.mxu0
  %v1442 = vadd.f32 0.0, %v1441
  %v1443 = vpop.f32.mrf.mxu0
  %1444 = vmatprep.mubr.f32.mxu0 0.0
  %1445 = vmatmul.mubr.f32.gmra.mxu0 %v1329
  %v1446 = vpop.f32.mrf.mxu0
  %v1447 = vadd.f32 0.0, %v1446
  %v1448 = vpop.f32.mrf.mxu0
  %1449 = vmatprep.mubr.f32.mxu0 0.0
  %1450 = vmatmul.mubr.f32.gmra.mxu0 %v1332
  %v1451 = vpop.f32.mrf.mxu0
  %v1452 = vadd.f32 0.0, %v1451
  %v1453 = vpop.f32.mrf.mxu0
  %1454 = vmatprep.mubr.f32.mxu0 0.0
  %1455 = vmatmul.mubr.f32.gmra.mxu0 %v1335
  %v1456 = vpop.f32.mrf.mxu0
  %v1457 = vadd.f32 0.0, %v1456
  %v1458 = vpop.f32.mrf.mxu0
  %1459 = vmatprep.mubr.f32.mxu0 0.0
  %1460 = vmatmul.mubr.f32.gmra.mxu0 %v1338
  %v1461 = vpop.f32.mrf.mxu0
  %v1462 = vadd.f32 0.0, %v1461
  %v1463 = vpop.f32.mrf.mxu0
  %1464 = vdwg.mxu0
  %v1465 = vld [vmem:[%s2 + $0x20] sm:$0xff]
  %v1466 = vld [vmem:[%s2 + $0x28] sm:$0xff]
  %v1467 = vld [vmem:[%s2 + $0x30] sm:$0xff]
  %v1468 = vld [vmem:[%s2 + $0x38] sm:$0xff]
  %vm1469 = vcmask 130048
  %v1471 = vsel %vm1469, %v1412, 0
  %v1474 = vsel %vm1469, %v1417, 0
  %v1477 = vsel %vm1469, %v1422, 0
  %v1480 = vsel %vm1469, %v1427, 0
  %v1483 = vsel %vm1469, %v1432, 0
  %v1486 = vsel %vm1469, %v1437, 0
  %v1489 = vsel %vm1469, %v1442, 0
  %v1492 = vsel %vm1469, %v1447, 0
  %v1495 = vsel %vm1469, %v1452, 0
  %v1498 = vsel %vm1469, %v1457, 0
  %1500 = vmatprep.subr.mxu0 0.0
  %1501 = vmatpush1.msra.mxu0 0.0
  %1502 = vmatprep.subr.mxu0 0.0
  %1503 = vmatpush1.msra.mxu0 0.0
  %1504 = vmatprep.subr.mxu0 0.0
  %1505 = vmatpush1.msra.mxu0 0.0
  %1506 = vmatprep.subr.mxu0 0.0
  %1507 = vmatpush1.msra.mxu0 0.0
  %1508 = vmatprep.subr.mxu0 0.0
  %1509 = vmatpush1.msra.mxu0 0.0
  %1510 = vmatprep.subr.mxu0 0.0
  %1511 = vmatpush1.msra.mxu0 0.0
  %1512 = vmatprep.subr.mxu0 0.0
  %1513 = vmatpush1.msra.mxu0 0.0
  %1514 = vmatprep.subr.mxu0 0.0
  %1515 = vmatpush1.msra.mxu0 0.0
  %1516 = vmatprep.subr.mxu0 0.0
  %1517 = vmatpush1.msra.mxu0 0.0
  %1518 = vmatprep.subr.mxu0 0.0
  %1519 = vmatpush1.msra.mxu0 0.0
  %1520 = vmatprep.subr.mxu0 0.0
  %1521 = vmatpush1.msra.mxu0 0.0
  %1522 = vmatprep.subr.mxu0 0.0
  %1523 = vmatpush1.msra.mxu0 0.0
  %1524 = vmatprep.subr.mxu0 0.0
  %1525 = vmatpush1.msra.mxu0 0.0
  %1526 = vmatprep.subr.mxu0 0.0
  %1527 = vmatpush1.msra.mxu0 0.0
  %1528 = vmatprep.subr.mxu0 0.0
  %1529 = vmatpush1.msra.mxu0 %v1468
  %1530 = vmatprep.subr.mxu0 0.0
  %1531 = vmatpush1.msra.mxu0 %v1467
  %1532 = vmatprep.subr.mxu0 0.0
  %1533 = vmatpush2.msra.mxu0 0.0
  %1534 = vmatprep.subr.mxu0 0.0
  %1535 = vmatpush2.msra.mxu0 0.0
  %1536 = vmatprep.subr.mxu0 0.0
  %1537 = vmatpush2.msra.mxu0 0.0
  %1538 = vmatprep.subr.mxu0 0.0
  %1539 = vmatpush2.msra.mxu0 0.0
  %1540 = vmatprep.subr.mxu0 0.0
  %1541 = vmatpush2.msra.mxu0 0.0
  %1542 = vmatprep.subr.mxu0 0.0
  %1543 = vmatpush2.msra.mxu0 0.0
  %1544 = vmatprep.subr.mxu0 0.0
  %1545 = vmatpush2.msra.mxu0 0.0
  %1546 = vmatprep.subr.mxu0 0.0
  %1547 = vmatpush2.msra.mxu0 0.0
  %1548 = vmatprep.subr.mxu0 0.0
  %1549 = vmatpush2.msra.mxu0 0.0
  %1550 = vmatprep.subr.mxu0 0.0
  %1551 = vmatpush2.msra.mxu0 0.0
  %1552 = vmatprep.subr.mxu0 0.0
  %1553 = vmatpush2.msra.mxu0 0.0
  %1554 = vmatprep.subr.mxu0 0.0
  %1555 = vmatpush2.msra.mxu0 0.0
  %1556 = vmatprep.subr.mxu0 0.0
  %1557 = vmatpush2.msra.mxu0 0.0
  %1558 = vmatprep.subr.mxu0 0.0
  %1559 = vmatpush2.msra.mxu0 0.0
  %1560 = vmatprep.subr.mxu0 0.0
  %1561 = vmatpush2.msra.mxu0 0.0
  %1562 = vmatprep.subr.mxu0 0.0
  %1563 = vmatpush2.msra.mxu0 0.0
  %1564 = vmatprep.mubr.f32.mxu0 0.0
  %1565 = vmatmul.mubr.f32.gmra.mxu0 %v1471
  %v1566 = vpop.f32.mrf.mxu0
  %v1567 = vadd.f32 0.0, %v1566
  %v1568 = vpop.f32.mrf.mxu0
  %1569 = vmatprep.mubr.f32.mxu0 0.0
  %1570 = vmatmul.mubr.f32.gmra.mxu0 %v1474
  %v1571 = vpop.f32.mrf.mxu0
  %v1572 = vadd.f32 0.0, %v1571
  %v1573 = vpop.f32.mrf.mxu0
  %1574 = vmatprep.mubr.f32.mxu0 0.0
  %1575 = vmatmul.mubr.f32.gmra.mxu0 %v1477
  %v1576 = vpop.f32.mrf.mxu0
  %v1577 = vadd.f32 0.0, %v1576
  %v1578 = vpop.f32.mrf.mxu0
  %1579 = vmatprep.mubr.f32.mxu0 0.0
  %1580 = vmatmul.mubr.f32.gmra.mxu0 %v1480
  %v1581 = vpop.f32.mrf.mxu0
  %v1582 = vadd.f32 0.0, %v1581
  %v1583 = vpop.f32.mrf.mxu0
  %1584 = vmatprep.mubr.f32.mxu0 0.0
  %1585 = vmatmul.mubr.f32.gmra.mxu0 %v1483
  %v1586 = vpop.f32.mrf.mxu0
  %v1587 = vadd.f32 0.0, %v1586
  %v1588 = vpop.f32.mrf.mxu0
  %1589 = vmatprep.mubr.f32.mxu0 0.0
  %1590 = vmatmul.mubr.f32.gmra.mxu0 %v1486
  %v1591 = vpop.f32.mrf.mxu0
  %v1592 = vadd.f32 0.0, %v1591
  %v1593 = vpop.f32.mrf.mxu0
  %1594 = vmatprep.mubr.f32.mxu0 0.0
  %1595 = vmatmul.mubr.f32.gmra.mxu0 %v1489
  %v1596 = vpop.f32.mrf.mxu0
  %v1597 = vadd.f32 0.0, %v1596
  %v1598 = vpop.f32.mrf.mxu0
  %1599 = vmatprep.mubr.f32.mxu0 0.0
  %1600 = vmatmul.mubr.f32.gmra.mxu0 %v1492
  %v1601 = vpop.f32.mrf.mxu0
  %v1602 = vadd.f32 0.0, %v1601
  %v1603 = vpop.f32.mrf.mxu0
  %1604 = vmatprep.mubr.f32.mxu0 0.0
  %1605 = vmatmul.mubr.f32.gmra.mxu0 %v1495
  %v1606 = vpop.f32.mrf.mxu0
  %v1607 = vadd.f32 0.0, %v1606
  %v1608 = vpop.f32.mrf.mxu0
  %1609 = vmatprep.mubr.f32.mxu0 0.0
  %1610 = vmatmul.mubr.f32.gmra.mxu0 %v1498
  %v1611 = vpop.f32.mrf.mxu0
  %v1612 = vadd.f32 0.0, %v1611
  %v1613 = vpop.f32.mrf.mxu0
  %1614 = vdwg.mxu0
  %v1616 = vsel %vm1469, %v1407, 0
  %1618 = vmatprep.subr.mxu0 0.0
  %1619 = vmatpush1.msra.mxu0 0.0
  %1620 = vmatprep.subr.mxu0 0.0
  %1621 = vmatpush1.msra.mxu0 0.0
  %1622 = vmatprep.subr.mxu0 0.0
  %1623 = vmatpush1.msra.mxu0 0.0
  %1624 = vmatprep.subr.mxu0 0.0
  %1625 = vmatpush1.msra.mxu0 0.0
  %1626 = vmatprep.subr.mxu0 0.0
  %1627 = vmatpush1.msra.mxu0 0.0
  %1628 = vmatprep.subr.mxu0 0.0
  %1629 = vmatpush1.msra.mxu0 0.0
  %1630 = vmatprep.subr.mxu0 0.0
  %1631 = vmatpush1.msra.mxu0 0.0
  %1632 = vmatprep.subr.mxu0 0.0
  %1633 = vmatpush1.msra.mxu0 0.0
  %1634 = vmatprep.subr.mxu0 0.0
  %1635 = vmatpush1.msra.mxu0 0.0
  %1636 = vmatprep.subr.mxu0 0.0
  %1637 = vmatpush1.msra.mxu0 0.0
  %1638 = vmatprep.subr.mxu0 0.0
  %1639 = vmatpush1.msra.mxu0 0.0
  %1640 = vmatprep.subr.mxu0 0.0
  %1641 = vmatpush1.msra.mxu0 0.0
  %1642 = vmatprep.subr.mxu0 0.0
  %1643 = vmatpush1.msra.mxu0 0.0
  %1644 = vmatprep.subr.mxu0 0.0
  %1645 = vmatpush1.msra.mxu0 0.0
  %1646 = vmatprep.subr.mxu0 0.0
  %1647 = vmatpush1.msra.mxu0 %v1466
  %1648 = vmatprep.subr.mxu0 0.0
  %1649 = vmatpush1.msra.mxu0 %v1465
  %1650 = vmatprep.subr.mxu0 0.0
  %1651 = vmatpush2.msra.mxu0 0.0
  %1652 = vmatprep.subr.mxu0 0.0
  %1653 = vmatpush2.msra.mxu0 0.0
  %1654 = vmatprep.subr.mxu0 0.0
  %1655 = vmatpush2.msra.mxu0 0.0
  %1656 = vmatprep.subr.mxu0 0.0
  %1657 = vmatpush2.msra.mxu0 0.0
  %1658 = vmatprep.subr.mxu0 0.0
  %1659 = vmatpush2.msra.mxu0 0.0
  %1660 = vmatprep.subr.mxu0 0.0
  %1661 = vmatpush2.msra.mxu0 0.0
  %1662 = vmatprep.subr.mxu0 0.0
  %1663 = vmatpush2.msra.mxu0 0.0
  %1664 = vmatprep.subr.mxu0 0.0
  %1665 = vmatpush2.msra.mxu0 0.0
  %1666 = vmatprep.subr.mxu0 0.0
  %1667 = vmatpush2.msra.mxu0 0.0
  %1668 = vmatprep.subr.mxu0 0.0
  %1669 = vmatpush2.msra.mxu0 0.0
  %1670 = vmatprep.subr.mxu0 0.0
  %1671 = vmatpush2.msra.mxu0 0.0
  %1672 = vmatprep.subr.mxu0 0.0
  %1673 = vmatpush2.msra.mxu0 0.0
  %1674 = vmatprep.subr.mxu0 0.0
  %1675 = vmatpush2.msra.mxu0 0.0
  %1676 = vmatprep.subr.mxu0 0.0
  %1677 = vmatpush2.msra.mxu0 0.0
  %1678 = vmatprep.subr.mxu0 0.0
  %1679 = vmatpush2.msra.mxu0 0.0
  %1680 = vmatprep.subr.mxu0 0.0
  %1681 = vmatpush2.msra.mxu0 0.0
  %1682 = vmatprep.mubr.f32.mxu0 0.0
  %1683 = vmatmul.mubr.f32.gmra.mxu0 %v1616
  %v1684 = vpop.f32.mrf.mxu0
  %v1685 = vadd.f32 %v1567, %v1684
  %v1686 = vpop.f32.mrf.mxu0
  %1687 = vmatprep.mubr.f32.mxu0 0.0
  %1688 = vmatmul.mubr.f32.gmra.mxu0 %v1471
  %v1689 = vpop.f32.mrf.mxu0
  %v1690 = vadd.f32 %v1572, %v1689
  %v1691 = vpop.f32.mrf.mxu0
  %1692 = vmatprep.mubr.f32.mxu0 0.0
  %1693 = vmatmul.mubr.f32.gmra.mxu0 %v1474
  %v1694 = vpop.f32.mrf.mxu0
  %v1695 = vadd.f32 %v1577, %v1694
  %v1696 = vpop.f32.mrf.mxu0
  %1697 = vmatprep.mubr.f32.mxu0 0.0
  %1698 = vmatmul.mubr.f32.gmra.mxu0 %v1477
  %v1699 = vpop.f32.mrf.mxu0
  %v1700 = vadd.f32 %v1582, %v1699
  %v1701 = vpop.f32.mrf.mxu0
  %1702 = vmatprep.mubr.f32.mxu0 0.0
  %1703 = vmatmul.mubr.f32.gmra.mxu0 %v1480
  %v1704 = vpop.f32.mrf.mxu0
  %v1705 = vadd.f32 %v1587, %v1704
  %v1706 = vpop.f32.mrf.mxu0
  %1707 = vmatprep.mubr.f32.mxu0 0.0
  %1708 = vmatmul.mubr.f32.gmra.mxu0 %v1483
  %v1709 = vpop.f32.mrf.mxu0
  %v1710 = vadd.f32 %v1592, %v1709
  %v1711 = vpop.f32.mrf.mxu0
  %1712 = vmatprep.mubr.f32.mxu0 0.0
  %1713 = vmatmul.mubr.f32.gmra.mxu0 %v1486
  %v1714 = vpop.f32.mrf.mxu0
  %v1715 = vadd.f32 %v1597, %v1714
  %v1716 = vpop.f32.mrf.mxu0
  %1717 = vmatprep.mubr.f32.mxu0 0.0
  %1718 = vmatmul.mubr.f32.gmra.mxu0 %v1489
  %v1719 = vpop.f32.mrf.mxu0
  %v1720 = vadd.f32 %v1602, %v1719
  %v1721 = vpop.f32.mrf.mxu0
  %1722 = vmatprep.mubr.f32.mxu0 0.0
  %1723 = vmatmul.mubr.f32.gmra.mxu0 %v1492
  %v1724 = vpop.f32.mrf.mxu0
  %v1725 = vadd.f32 %v1607, %v1724
  %v1726 = vpop.f32.mrf.mxu0
  %1727 = vmatprep.mubr.f32.mxu0 0.0
  %1728 = vmatmul.mubr.f32.gmra.mxu0 %v1495
  %v1729 = vpop.f32.mrf.mxu0
  %v1730 = vadd.f32 %v1612, %v1729
  %v1731 = vpop.f32.mrf.mxu0
  %1732 = vdwg.mxu0
  %v1733 = vld [vmem:[%s2 + $0x40] sm:$0xff]
  %v1734 = vld [vmem:[%s2 + $0x48] sm:$0xff]
  %v1736 = vsel %vm1469, %v1462, 0
  %1738 = vmatprep.subr.mxu0 0.0
  %1739 = vmatpush1.msra.mxu0 0.0
  %1740 = vmatprep.subr.mxu0 0.0
  %1741 = vmatpush1.msra.mxu0 0.0
  %1742 = vmatprep.subr.mxu0 0.0
  %1743 = vmatpush1.msra.mxu0 0.0
  %1744 = vmatprep.subr.mxu0 0.0
  %1745 = vmatpush1.msra.mxu0 0.0
  %1746 = vmatprep.subr.mxu0 0.0
  %1747 = vmatpush1.msra.mxu0 0.0
  %1748 = vmatprep.subr.mxu0 0.0
  %1749 = vmatpush1.msra.mxu0 0.0
  %1750 = vmatprep.subr.mxu0 0.0
  %1751 = vmatpush1.msra.mxu0 0.0
  %1752 = vmatprep.subr.mxu0 0.0
  %1753 = vmatpush1.msra.mxu0 0.0
  %1754 = vmatprep.subr.mxu0 0.0
  %1755 = vmatpush1.msra.mxu0 0.0
  %1756 = vmatprep.subr.mxu0 0.0
  %1757 = vmatpush1.msra.mxu0 0.0
  %1758 = vmatprep.subr.mxu0 0.0
  %1759 = vmatpush1.msra.mxu0 0.0
  %1760 = vmatprep.subr.mxu0 0.0
  %1761 = vmatpush1.msra.mxu0 0.0
  %1762 = vmatprep.subr.mxu0 0.0
  %1763 = vmatpush1.msra.mxu0 0.0
  %1764 = vmatprep.subr.mxu0 0.0
  %1765 = vmatpush1.msra.mxu0 0.0
  %1766 = vmatprep.subr.mxu0 0.0
  %1767 = vmatpush1.msra.mxu0 %v1734
  %1768 = vmatprep.subr.mxu0 0.0
  %1769 = vmatpush1.msra.mxu0 %v1733
  %1770 = vmatprep.subr.mxu0 0.0
  %1771 = vmatpush2.msra.mxu0 0.0
  %1772 = vmatprep.subr.mxu0 0.0
  %1773 = vmatpush2.msra.mxu0 0.0
  %1774 = vmatprep.subr.mxu0 0.0
  %1775 = vmatpush2.msra.mxu0 0.0
  %1776 = vmatprep.subr.mxu0 0.0
  %1777 = vmatpush2.msra.mxu0 0.0
  %1778 = vmatprep.subr.mxu0 0.0
  %1779 = vmatpush2.msra.mxu0 0.0
  %1780 = vmatprep.subr.mxu0 0.0
  %1781 = vmatpush2.msra.mxu0 0.0
  %1782 = vmatprep.subr.mxu0 0.0
  %1783 = vmatpush2.msra.mxu0 0.0
  %1784 = vmatprep.subr.mxu0 0.0
  %1785 = vmatpush2.msra.mxu0 0.0
  %1786 = vmatprep.subr.mxu0 0.0
  %1787 = vmatpush2.msra.mxu0 0.0
  %1788 = vmatprep.subr.mxu0 0.0
  %1789 = vmatpush2.msra.mxu0 0.0
  %1790 = vmatprep.subr.mxu0 0.0
  %1791 = vmatpush2.msra.mxu0 0.0
  %1792 = vmatprep.subr.mxu0 0.0
  %1793 = vmatpush2.msra.mxu0 0.0
  %1794 = vmatprep.subr.mxu0 0.0
  %1795 = vmatpush2.msra.mxu0 0.0
  %1796 = vmatprep.subr.mxu0 0.0
  %1797 = vmatpush2.msra.mxu0 0.0
  %1798 = vmatprep.subr.mxu0 0.0
  %1799 = vmatpush2.msra.mxu0 0.0
  %1800 = vmatprep.subr.mxu0 0.0
  %1801 = vmatpush2.msra.mxu0 0.0
  %1802 = vmatprep.mubr.f32.mxu0 0.0
  %1803 = vmatmul.mubr.f32.gmra.mxu0 %v1474
  %v1804 = vpop.f32.mrf.mxu0
  %v1805 = vadd.f32 0.0, %v1804
  %v1806 = vpop.f32.mrf.mxu0
  %1807 = vmatprep.mubr.f32.mxu0 0.0
  %1808 = vmatmul.mubr.f32.gmra.mxu0 %v1477
  %v1809 = vpop.f32.mrf.mxu0
  %v1810 = vadd.f32 0.0, %v1809
  %v1811 = vpop.f32.mrf.mxu0
  %1812 = vmatprep.mubr.f32.mxu0 0.0
  %1813 = vmatmul.mubr.f32.gmra.mxu0 %v1480
  %v1814 = vpop.f32.mrf.mxu0
  %v1815 = vadd.f32 0.0, %v1814
  %v1816 = vpop.f32.mrf.mxu0
  %1817 = vmatprep.mubr.f32.mxu0 0.0
  %1818 = vmatmul.mubr.f32.gmra.mxu0 %v1483
  %v1819 = vpop.f32.mrf.mxu0
  %v1820 = vadd.f32 0.0, %v1819
  %v1821 = vpop.f32.mrf.mxu0
  %1822 = vmatprep.mubr.f32.mxu0 0.0
  %1823 = vmatmul.mubr.f32.gmra.mxu0 %v1486
  %v1824 = vpop.f32.mrf.mxu0
  %v1825 = vadd.f32 0.0, %v1824
  %v1826 = vpop.f32.mrf.mxu0
  %1827 = vmatprep.mubr.f32.mxu0 0.0
  %1828 = vmatmul.mubr.f32.gmra.mxu0 %v1489
  %v1829 = vpop.f32.mrf.mxu0
  %v1830 = vadd.f32 0.0, %v1829
  %v1831 = vpop.f32.mrf.mxu0
  %1832 = vmatprep.mubr.f32.mxu0 0.0
  %1833 = vmatmul.mubr.f32.gmra.mxu0 %v1492
  %v1834 = vpop.f32.mrf.mxu0
  %v1835 = vadd.f32 0.0, %v1834
  %v1836 = vpop.f32.mrf.mxu0
  %1837 = vmatprep.mubr.f32.mxu0 0.0
  %1838 = vmatmul.mubr.f32.gmra.mxu0 %v1495
  %v1839 = vpop.f32.mrf.mxu0
  %v1840 = vadd.f32 0.0, %v1839
  %v1841 = vpop.f32.mrf.mxu0
  %1842 = vmatprep.mubr.f32.mxu0 0.0
  %1843 = vmatmul.mubr.f32.gmra.mxu0 %v1498
  %v1844 = vpop.f32.mrf.mxu0
  %v1845 = vadd.f32 0.0, %v1844
  %v1846 = vpop.f32.mrf.mxu0
  %1847 = vmatprep.mubr.f32.mxu0 0.0
  %1848 = vmatmul.mubr.f32.gmra.mxu0 %v1736
  %v1849 = vpop.f32.mrf.mxu0
  %v1850 = vadd.f32 0.0, %v1849
  %v1851 = vpop.f32.mrf.mxu0
  %1852 = vdwg.mxu0
  %v1853 = vadd.f32 %v1685, %v1805
  %v1854 = vadd.f32 %v1690, %v1810
  %v1855 = vadd.f32 %v1695, %v1815
  %v1856 = vadd.f32 %v1700, %v1820
  %v1857 = vadd.f32 %v1705, %v1825
  %v1858 = vadd.f32 %v1710, %v1830
  %v1859 = vadd.f32 %v1715, %v1835
  %v1860 = vadd.f32 %v1720, %v1840
  %v1861 = vadd.f32 %v1725, %v1845
  %v1862 = vadd.f32 %v1730, %v1850
  %v1863 = vld [vmem:[%s2 + $0x70] sm:$0x1]
  %v1864 = vlaneseq
  %v1865 = vshrl.u32 %v1864, 7
  %v1866 = vsub.s32 0, %v1865
  %v1867 = vrot.slane %v1863, %v1866
  %v1868 = vadd.f32 %v1853, %v1867
  %v1869 = vadd.f32 %v1854, %v1867
  %v1870 = vadd.f32 %v1855, %v1867
  %v1871 = vadd.f32 %v1856, %v1867
  %v1872 = vadd.f32 %v1857, %v1867
  %v1873 = vadd.f32 %v1858, %v1867
  %v1874 = vadd.f32 %v1859, %v1867
  %v1875 = vadd.f32 %v1860, %v1867
  %v1876 = vadd.f32 %v1861, %v1867
  %v1877 = vadd.f32 %v1862, %v1867
  %v1878 = vmax.f32 %v1868, 0.0
  %v1879 = vmax.f32 %v1869, 0.0
  %v1880 = vmax.f32 %v1870, 0.0
  %v1881 = vmax.f32 %v1871, 0.0
  %v1882 = vmax.f32 %v1872, 0.0
  %v1883 = vmax.f32 %v1873, 0.0
  %v1884 = vmax.f32 %v1874, 0.0
  %v1885 = vmax.f32 %v1875, 0.0
  %v1886 = vmax.f32 %v1876, 0.0
  %v1887 = vmax.f32 %v1877, 0.0
  %v1888 = vsel %vm1469, %v1878, -inf
  %v1889 = vsel %vm1469, %v1879, -inf
  %v1890 = vsel %vm1469, %v1880, -inf
  %v1891 = vsel %vm1469, %v1881, -inf
  %v1892 = vsel %vm1469, %v1882, -inf
  %v1893 = vmax.f32 %v1888, %v1892
  %v1894 = vsel %vm1469, %v1883, -inf
  %v1895 = vmax.f32 %v1889, %v1894
  %v1896 = vsel %vm1469, %v1884, -inf
  %v1897 = vmax.f32 %v1890, %v1896
  %v1898 = vsel %vm1469, %v1885, -inf
  %v1899 = vmax.f32 %v1891, %v1898
  %v1900 = vsel %vm1469, %v1886, -inf
  %v1901 = vmax.f32 %v1893, %v1900
  %v1902 = vsel %vm1469, %v1887, -inf
  %v1903 = vmax.f32 %v1895, %v1902
  %v1904 = vmax.f32 %v1901, %v1903
  %v1905 = vmax.f32 %v1897, %v1899
  %v1906 = vmax.f32 %v1904, %v1905
  %v1907 = vld [vmem:[%s2 + $0x50] sm:$0xff]
  %v1908 = vld [vmem:[%s2 + $0x58] sm:$0xff]
  %v1909 = vld [vmem:[%s2 + $0x60] sm:$0xff]
  %v1910 = vld [vmem:[%s2 + $0x68] sm:$0xff]
  %1911 = vmatprep.subr.mxu0 0.0
  %1912 = vmatpush1.msra.mxu0 0.0
  %1913 = vmatprep.subr.mxu0 0.0
  %1914 = vmatpush1.msra.mxu0 0.0
  %1915 = vmatprep.subr.mxu0 0.0
  %1916 = vmatpush1.msra.mxu0 0.0
  %1917 = vmatprep.subr.mxu0 0.0
  %1918 = vmatpush1.msra.mxu0 0.0
  %1919 = vmatprep.subr.mxu0 0.0
  %1920 = vmatpush1.msra.mxu0 0.0
  %1921 = vmatprep.subr.mxu0 0.0
  %1922 = vmatpush1.msra.mxu0 0.0
  %1923 = vmatprep.subr.mxu0 0.0
  %1924 = vmatpush1.msra.mxu0 0.0
  %1925 = vmatprep.subr.mxu0 0.0
  %1926 = vmatpush1.msra.mxu0 0.0
  %1927 = vmatprep.subr.mxu0 0.0
  %1928 = vmatpush1.msra.mxu0 0.0
  %1929 = vmatprep.subr.mxu0 0.0
  %1930 = vmatpush1.msra.mxu0 0.0
  %1931 = vmatprep.subr.mxu0 0.0
  %1932 = vmatpush1.msra.mxu0 0.0
  %1933 = vmatprep.subr.mxu0 0.0
  %1934 = vmatpush1.msra.mxu0 0.0
  %1935 = vmatprep.subr.mxu0 0.0
  %1936 = vmatpush1.msra.mxu0 0.0
  %1937 = vmatprep.subr.mxu0 0.0
  %1938 = vmatpush1.msra.mxu0 0.0
  %1939 = vmatprep.subr.mxu0 0.0
  %1940 = vmatpush1.msra.mxu0 %v1910
  %1941 = vmatprep.subr.mxu0 0.0
  %1942 = vmatpush1.msra.mxu0 %v1909
  %1943 = vmatprep.subr.mxu0 0.0
  %1944 = vmatpush2.msra.mxu0 0.0
  %1945 = vmatprep.subr.mxu0 0.0
  %1946 = vmatpush2.msra.mxu0 0.0
  %1947 = vmatprep.subr.mxu0 0.0
  %1948 = vmatpush2.msra.mxu0 0.0
  %1949 = vmatprep.subr.mxu0 0.0
  %1950 = vmatpush2.msra.mxu0 0.0
  %1951 = vmatprep.subr.mxu0 0.0
  %1952 = vmatpush2.msra.mxu0 0.0
  %1953 = vmatprep.subr.mxu0 0.0
  %1954 = vmatpush2.msra.mxu0 0.0
  %1955 = vmatprep.subr.mxu0 0.0
  %1956 = vmatpush2.msra.mxu0 0.0
  %1957 = vmatprep.subr.mxu0 0.0
  %1958 = vmatpush2.msra.mxu0 0.0
  %1959 = vmatprep.subr.mxu0 0.0
  %1960 = vmatpush2.msra.mxu0 0.0
  %1961 = vmatprep.subr.mxu0 0.0
  %1962 = vmatpush2.msra.mxu0 0.0
  %1963 = vmatprep.subr.mxu0 0.0
  %1964 = vmatpush2.msra.mxu0 0.0
  %1965 = vmatprep.subr.mxu0 0.0
  %1966 = vmatpush2.msra.mxu0 0.0
  %1967 = vmatprep.subr.mxu0 0.0
  %1968 = vmatpush2.msra.mxu0 0.0
  %1969 = vmatprep.subr.mxu0 0.0
  %1970 = vmatpush2.msra.mxu0 0.0
  %1971 = vmatprep.subr.mxu0 0.0
  %1972 = vmatpush2.msra.mxu0 0.0
  %1973 = vmatprep.subr.mxu0 0.0
  %1974 = vmatpush2.msra.mxu0 0.0
  %1975 = vmatprep.mubr.f32.mxu0 0.0
  %1976 = vmatmul.mubr.f32.gmra.mxu0 %v1736
  %v1977 = vpop.f32.mrf.mxu0
  %v1978 = vadd.f32 0.0, %v1977
  %v1979 = vpop.f32.mrf.mxu0
  %1980 = vdwg.mxu0
  %1981 = vmatprep.subr.mxu0 0.0
  %1982 = vmatpush1.msra.mxu0 0.0
  %1983 = vmatprep.subr.mxu0 0.0
  %1984 = vmatpush1.msra.mxu0 0.0
  %1985 = vmatprep.subr.mxu0 0.0
  %1986 = vmatpush1.msra.mxu0 0.0
  %1987 = vmatprep.subr.mxu0 0.0
  %1988 = vmatpush1.msra.mxu0 0.0
  %1989 = vmatprep.subr.mxu0 0.0
  %1990 = vmatpush1.msra.mxu0 0.0
  %1991 = vmatprep.subr.mxu0 0.0
  %1992 = vmatpush1.msra.mxu0 0.0
  %1993 = vmatprep.subr.mxu0 0.0
  %1994 = vmatpush1.msra.mxu0 0.0
  %1995 = vmatprep.subr.mxu0 0.0
  %1996 = vmatpush1.msra.mxu0 0.0
  %1997 = vmatprep.subr.mxu0 0.0
  %1998 = vmatpush1.msra.mxu0 0.0
  %1999 = vmatprep.subr.mxu0 0.0
  %2000 = vmatpush1.msra.mxu0 0.0
  %2001 = vmatprep.subr.mxu0 0.0
  %2002 = vmatpush1.msra.mxu0 0.0
  %2003 = vmatprep.subr.mxu0 0.0
  %2004 = vmatpush1.msra.mxu0 0.0
  %2005 = vmatprep.subr.mxu0 0.0
  %2006 = vmatpush1.msra.mxu0 0.0
  %2007 = vmatprep.subr.mxu0 0.0
  %2008 = vmatpush1.msra.mxu0 0.0
  %2009 = vmatprep.subr.mxu0 0.0
  %2010 = vmatpush1.msra.mxu0 %v1908
  %2011 = vmatprep.subr.mxu0 0.0
  %2012 = vmatpush1.msra.mxu0 %v1907
  %2013 = vmatprep.subr.mxu0 0.0
  %2014 = vmatpush2.msra.mxu0 0.0
  %2015 = vmatprep.subr.mxu0 0.0
  %2016 = vmatpush2.msra.mxu0 0.0
  %2017 = vmatprep.subr.mxu0 0.0
  %2018 = vmatpush2.msra.mxu0 0.0
  %2019 = vmatprep.subr.mxu0 0.0
  %2020 = vmatpush2.msra.mxu0 0.0
  %2021 = vmatprep.subr.mxu0 0.0
  %2022 = vmatpush2.msra.mxu0 0.0
  %2023 = vmatprep.subr.mxu0 0.0
  %2024 = vmatpush2.msra.mxu0 0.0
  %2025 = vmatprep.subr.mxu0 0.0
  %2026 = vmatpush2.msra.mxu0 0.0
  %2027 = vmatprep.subr.mxu0 0.0
  %2028 = vmatpush2.msra.mxu0 0.0
  %2029 = vmatprep.subr.mxu0 0.0
  %2030 = vmatpush2.msra.mxu0 0.0
  %2031 = vmatprep.subr.mxu0 0.0
  %2032 = vmatpush2.msra.mxu0 0.0
  %2033 = vmatprep.subr.mxu0 0.0
  %2034 = vmatpush2.msra.mxu0 0.0
  %2035 = vmatprep.subr.mxu0 0.0
  %2036 = vmatpush2.msra.mxu0 0.0
  %2037 = vmatprep.subr.mxu0 0.0
  %2038 = vmatpush2.msra.mxu0 0.0
  %2039 = vmatprep.subr.mxu0 0.0
  %2040 = vmatpush2.msra.mxu0 0.0
  %2041 = vmatprep.subr.mxu0 0.0
  %2042 = vmatpush2.msra.mxu0 0.0
  %2043 = vmatprep.subr.mxu0 0.0
  %2044 = vmatpush2.msra.mxu0 0.0
  %2045 = vmatprep.mubr.f32.mxu0 0.0
  %2046 = vmatmul.mubr.f32.gmra.mxu0 %v1498
  %v2047 = vpop.f32.mrf.mxu0
  %v2048 = vadd.f32 %v1978, %v2047
  %v2049 = vpop.f32.mrf.mxu0
  %2050 = vdwg.mxu0
  %v2051 = vld [vmem:[%s2 + $0x78] sm:$0x1]
  %v2052 = vlaneseq
  %v2053 = vshrl.u32 %v2052, 7
  %v2054 = vsub.s32 0, %v2053
  %v2055 = vrot.slane %v2051, %v2054
  %v2056 = vadd.f32 %v2048, %v2055
  %v2057 = vmax.f32 %v2056, 0.0
  %v2058 = vmax.f32 %v1906, %v2057
  %v2059 = vld [vmem:[%s1 + $0x80] sm:$0xff]
  %v2060 = vld [vmem:[%s1 + $0x88] sm:$0xff]
  %v2062 = vsel %vm1469, %v2058, 0
  %2064 = vmatprep.subr.mxu0 0.0
  %2065 = vmatpush1.msra.mxu0 0.0
  %2066 = vmatprep.subr.mxu0 0.0
  %2067 = vmatpush1.msra.mxu0 0.0
  %2068 = vmatprep.subr.mxu0 0.0
  %2069 = vmatpush1.msra.mxu0 0.0
  %2070 = vmatprep.subr.mxu0 0.0
  %2071 = vmatpush1.msra.mxu0 0.0
  %2072 = vmatprep.subr.mxu0 0.0
  %2073 = vmatpush1.msra.mxu0 0.0
  %2074 = vmatprep.subr.mxu0 0.0
  %2075 = vmatpush1.msra.mxu0 0.0
  %2076 = vmatprep.subr.mxu0 0.0
  %2077 = vmatpush1.msra.mxu0 0.0
  %2078 = vmatprep.subr.mxu0 0.0
  %2079 = vmatpush1.msra.mxu0 0.0
  %2080 = vmatprep.subr.mxu0 0.0
  %2081 = vmatpush1.msra.mxu0 0.0
  %2082 = vmatprep.subr.mxu0 0.0
  %2083 = vmatpush1.msra.mxu0 0.0
  %2084 = vmatprep.subr.mxu0 0.0
  %2085 = vmatpush1.msra.mxu0 0.0
  %2086 = vmatprep.subr.mxu0 0.0
  %2087 = vmatpush1.msra.mxu0 0.0
  %2088 = vmatprep.subr.mxu0 0.0
  %2089 = vmatpush1.msra.mxu0 0.0
  %2090 = vmatprep.subr.mxu0 0.0
  %2091 = vmatpush1.msra.mxu0 0.0
  %2092 = vmatprep.subr.mxu0 0.0
  %2093 = vmatpush1.msra.mxu0 %v2060
  %2094 = vmatprep.subr.mxu0 0.0
  %2095 = vmatpush1.msra.mxu0 %v2059
  %2096 = vmatprep.subr.mxu0 0.0
  %2097 = vmatpush2.msra.mxu0 0.0
  %2098 = vmatprep.subr.mxu0 0.0
  %2099 = vmatpush2.msra.mxu0 0.0
  %2100 = vmatprep.subr.mxu0 0.0
  %2101 = vmatpush2.msra.mxu0 0.0
  %2102 = vmatprep.subr.mxu0 0.0
  %2103 = vmatpush2.msra.mxu0 0.0
  %2104 = vmatprep.subr.mxu0 0.0
  %2105 = vmatpush2.msra.mxu0 0.0
  %2106 = vmatprep.subr.mxu0 0.0
  %2107 = vmatpush2.msra.mxu0 0.0
  %2108 = vmatprep.subr.mxu0 0.0
  %2109 = vmatpush2.msra.mxu0 0.0
  %2110 = vmatprep.subr.mxu0 0.0
  %2111 = vmatpush2.msra.mxu0 0.0
  %2112 = vmatprep.subr.mxu0 0.0
  %2113 = vmatpush2.msra.mxu0 0.0
  %2114 = vmatprep.subr.mxu0 0.0
  %2115 = vmatpush2.msra.mxu0 0.0
  %2116 = vmatprep.subr.mxu0 0.0
  %2117 = vmatpush2.msra.mxu0 0.0
  %2118 = vmatprep.subr.mxu0 0.0
  %2119 = vmatpush2.msra.mxu0 0.0
  %2120 = vmatprep.subr.mxu0 0.0
  %2121 = vmatpush2.msra.mxu0 0.0
  %2122 = vmatprep.subr.mxu0 0.0
  %2123 = vmatpush2.msra.mxu0 0.0
  %2124 = vmatprep.subr.mxu0 0.0
  %2125 = vmatpush2.msra.mxu0 0.0
  %2126 = vmatprep.subr.mxu0 0.0
  %2127 = vmatpush2.msra.mxu0 0.0
  %2128 = vmatprep.mubr.f32.mxu0 0.0
  %2129 = vmatmul.mubr.f32.gmra.mxu0 %v2062
  %v2130 = vpop.f32.mrf.mxu0
  %v2131 = vadd.f32 0.0, %v2130
  %v2132 = vpop.f32.mrf.mxu0
  %2133 = vdwg.mxu0
  %v2134 = vadd.f32 %v1225, %v2131
  %2135 = vst [vmem:[%s3] sm:$0xff] %v2134
  // Predicated region
  $region14: #{forward.1} parent=0 // pred_check
    _
  $region15: #{forward.1} parent=0 // pred_check_branch
    %2137 = sbr.rel (0) target = $region17
  $region16: #{forward.1} parent=0 // pred_region
    _
  $region17: #{forward.1} parent=0 // pred_fallthru
    _
  // Predicated region
  $region18: #{forward.1} parent=0 // pred_check
    _
  $region19: #{forward.1} parent=0 // pred_check_branch
    %2139 = sbr.rel (0) target = $region21
  $region20: #{forward.1} parent=0 // pred_region
    _
  $region21: #{forward.1} parent=0 // pred_fallthru
    _

</llo_original>
